<compile_context>
chip_gen: v5e
topology: v5e:2x2
jax: 0.10.0
libtpu: 0.0.40
codegen_flags: <defaults>
</compile_context>

<pallas_src>
import jax
import jax.numpy as jnp
from jax import lax
from jax.experimental import pallas as pl
from jax.experimental.pallas import tpu as pltpu


def _round_up(x, m):
    return (x + m - 1) // m * m


# ----------------------------------------------------------------------------
# Pallas kernel: one full image of the bottleneck forward.
# ----------------------------------------------------------------------------
def _bottleneck_kernel(x_ref, w1_ref, b1_ref, w2_ref, b2_ref, w3_ref, b3_ref,
                       out_ref, hpad_ref):
    # x_ref   : (1, H, W, Cin)     bf16
    # w1_ref  : (Cin, P)           bf16  (BN1 scale folded in)
    # b1_ref  : (1, P)             f32
    # w2_ref  : (3, 3P, P)         bf16  (BN2 scale folded in; row = dx*P + cin)
    # b2_ref  : (1, P)             f32
    # w3_ref  : (P, Cout)          bf16  (BN3 scale folded in)
    # b3_ref  : (1, Cout)          f32
    # out_ref : (1, H, W, Cout)    bf16
    # hpad_ref: (H + 4, Wpad, P)   bf16 scratch holding the zero-padded conv1
    #           output.  Flattened-row convention: padded-grid pixel (r, c),
    #           r in [0, H+2), c in [0, W+2), lives at flat index
    #           (1 + r) * Wpad + (c - 1); the zero ring is provided by the
    #           leading zero row, the zeroed pad columns [W, Wpad) and the
    #           zeroed top/bottom rows.  Every 3x3 tap is then a contiguous
    #           flat slice.
    _, H, W, Cin = x_ref.shape
    P = w1_ref.shape[1]
    Cout = w3_ref.shape[1]
    R, Wpad, _ = hpad_ref.shape

    # ---- zero the padding regions (re-done every step: megacore-safe) ----
    hpad_ref[:, W:, :] = jnp.zeros((R, Wpad - W, P), hpad_ref.dtype)
    hpad_ref[0:2, :, :] = jnp.zeros((2, Wpad, P), hpad_ref.dtype)
    hpad_ref[H + 2:, :, :] = jnp.zeros((R - (H + 2), Wpad, P), hpad_ref.dtype)

    # ---- relu(x) -> conv1 (1x1, MXU, f32 acc) -> +bias -> relu -> bf16 ----
    xm = jnp.maximum(x_ref[0], 0)                                # (H, W, Cin) bf16
    h1 = jnp.dot(xm.reshape(H * W, Cin), w1_ref[...],
                 preferred_element_type=jnp.float32)
    h1 = jnp.maximum(h1 + b1_ref[...], 0.0)
    hpad_ref[2:H + 2, 0:W, :] = h1.astype(hpad_ref.dtype).reshape(H, W, P)

    # ---- conv2 (3x3, stride 1, pad 1) as 3 MXU matmuls with K = 3P ----
    # Build the three dx-shifted copies once and lane-concatenate them; the dy
    # shifts are then free, sublane-aligned slices (Wpad is a multiple of 8).
    # TODO(synk): the dx=0 / dx=2 copies are sublane-misaligned loads; a
    #             pltpu.roll (XLU slot) variant would remove those relayouts.
    L = (H + 2) * Wpad
    h_all = hpad_ref[...].reshape(R * Wpad, P)
    hcat = jnp.concatenate(
        [h_all[Wpad - 1 + dx:Wpad - 1 + dx + L] for dx in range(3)], axis=-1)
    acc = jnp.dot(hcat[0:H * Wpad], w2_ref[0],
                  preferred_element_type=jnp.float32)
    acc = acc + jnp.dot(hcat[Wpad:Wpad + H * Wpad], w2_ref[1],
                        preferred_element_type=jnp.float32)
    acc = acc + jnp.dot(hcat[2 * Wpad:2 * Wpad + H * Wpad], w2_ref[2],
                        preferred_element_type=jnp.float32)
    g = jnp.maximum(acc + b2_ref[...], 0.0)                      # (H*Wpad, P) f32

    # Drop the (Wpad - W) padded output columns before conv3 (aligned slices).
    g = g.reshape(H, Wpad, P)[:, :W, :].reshape(H * W, P).astype(jnp.bfloat16)

    # ---- conv3 (1x1) + bias + residual (identity = relu(x); Cin == Cout) ----
    o = jnp.dot(g, w3_ref[...], preferred_element_type=jnp.float32)
    o = (o + b3_ref[...]).reshape(H, W, Cout)
    out_ref[0] = (o + jnp.maximum(x_ref[0], 0).astype(jnp.float32)
                  ).astype(out_ref.dtype)


# ----------------------------------------------------------------------------
# Wrapper: grid over batch only, one full image per step.
# ----------------------------------------------------------------------------
def _vmem_limit_bytes():
    # Generation-aware scoped-VMEM budget (v7x: 64 MiB physical, v5e/v6e: 128).
    cap = 64 * 1024 * 1024                       # safe default for any chip
    try:
        info = pltpu.get_tpu_info()
        cap = int(getattr(info, "vmem_capacity_bytes", cap)) or cap
    except Exception:
        pass
    return min(int(cap * 3 // 4), 100 * 1024 * 1024)


@jax.jit
def bottleneck_pallas(x_nhwc, params):
    """DiracNet Bottleneck forward (stride=1, downsample=None path).

    x_nhwc: (N, H, W, Cin) bfloat16 NHWC.  Returns (N, H, W, Cout) bfloat16.
    """
    w1, b1, w2, b2, w3, b3 = params
    N, H, W, Cin = x_nhwc.shape
    P = w1.shape[1]
    Cout = w3.shape[1]
    if Cin != Cout:
        raise ValueError("kernel implements the downsample=None path (Cin == Cout)")
    Wpad = _round_up(W + 1, 8)

    # TODO(synk): very large images would need row-strip tiling + halo exchange;
    #             every ResNet-ImageNet stage fits one full image per grid step.
    # TODO(synk): 14x14 / 7x7 stages (W not a multiple of 8) would benefit from
    #             blocking several batch images per grid step (larger, aligned M).
    # TODO(synk): mark the constant-index weight/bias in_specs
    #             pipeline_mode=pl.Buffered(1) once single-buffering constant
    #             operands is load-bearing (v7x, 512-plane stage).
    return pl.pallas_call(
        _bottleneck_kernel,
        out_shape=jax.ShapeDtypeStruct((N, H, W, Cout), jnp.bfloat16),
        grid_spec=pltpu.PrefetchScalarGridSpec(
            num_scalar_prefetch=0,
            grid=(N,),                                  # one image per grid step
            in_specs=[
                pl.BlockSpec((1, H, W, Cin), lambda n: (n, 0, 0, 0)),
                # weights / biases: constant index_map -> fetched once
                pl.BlockSpec((Cin, P), lambda n: (0, 0)),
                pl.BlockSpec((1, P), lambda n: (0, 0)),
                pl.BlockSpec((3, 3 * P, P), lambda n: (0, 0, 0)),
                pl.BlockSpec((1, P), lambda n: (0, 0)),
                pl.BlockSpec((P, Cout), lambda n: (0, 0)),
                pl.BlockSpec((1, Cout), lambda n: (0, 0)),
            ],
            out_specs=pl.BlockSpec((1, H, W, Cout), lambda n: (n, 0, 0, 0)),
            scratch_shapes=[
                pltpu.VMEM((H + 4, Wpad, P), jnp.bfloat16),   # padded conv1 out
            ]),
        compiler_params=pltpu.CompilerParams(
            dimension_semantics=("parallel",),
            vmem_limit_bytes=_vmem_limit_bytes()),
    )(x_nhwc, w1, b1, w2, b2, w3, b3)


# ----------------------------------------------------------------------------
# Parameter construction (plain-JAX glue, deterministic)
# ----------------------------------------------------------------------------
def _dirac_delta(out_c, in_c, k):
    d = jnp.zeros((out_c, in_c, k, k), jnp.float32)
    n = min(out_c, in_c)
    idx = jnp.arange(n)
    return d.at[idx, idx, k // 2, k // 2].set(1.0)


def _dirac_effective_weight(w_raw, alpha=5.0, beta=1e-5):
    out_c, in_c, kh, kw = w_raw.shape
    flat = w_raw.reshape(out_c, -1)
    norm = jnp.sqrt(jnp.sum(flat * flat, axis=1, keepdims=True))
    w_n = (flat / jnp.maximum(norm, 1e-12)).reshape(w_raw.shape)
    return alpha * _dirac_delta(out_c, in_c, kh) + beta * w_n


def _fold_bn(gamma, beta_bn, mean, var, eps=1e-5):
    scale = gamma / jnp.sqrt(var + eps)
    bias = beta_bn - mean * scale
    return scale, bias


def make_bottleneck_params(key, inplanes, planes, expansion=4):
    """Returns (kernel_params, reference_weights)."""
    ks = jax.random.split(key, 6)
    outplanes = planes * expansion

    def bn_params(k, c):
        k1, k2, k3, k4 = jax.random.split(k, 4)
        gamma = 1.0 + 0.1 * jax.random.normal(k1, (c,), jnp.float32)
        beta = 0.05 * jax.random.normal(k2, (c,), jnp.float32)
        mean = 0.1 * jax.random.normal(k3, (c,), jnp.float32)
        var = 0.5 + 0.5 * jnp.abs(jax.random.normal(k4, (c,), jnp.float32))
        return _fold_bn(gamma, beta, mean, var)

    w1_eff = _dirac_effective_weight(
        0.1 * jax.random.normal(ks[0], (planes, inplanes, 1, 1), jnp.float32))
    w2_eff = _dirac_effective_weight(
        0.1 * jax.random.normal(ks[1], (planes, planes, 3, 3), jnp.float32))
    w3_eff = _dirac_effective_weight(
        0.1 * jax.random.normal(ks[2], (outplanes, planes, 1, 1), jnp.float32))
    s1, b1 = bn_params(ks[3], planes)
    s2, b2 = bn_params(ks[4], planes)
    s3, b3 = bn_params(ks[5], outplanes)

    # Fold the BN scales into the conv weights (per output channel), then round
    # to bf16 once; kernel and reference both use these folded/rounded weights
    # so the comparison isolates kernel structure from quantization noise.
    w1_fold = (w1_eff * s1[:, None, None, None]).astype(jnp.bfloat16)
    w2_fold = (w2_eff * s2[:, None, None, None]).astype(jnp.bfloat16)
    w3_fold = (w3_eff * s3[:, None, None, None]).astype(jnp.bfloat16)

    # MXU-friendly kernel layouts.
    w1_k = w1_fold[:, :, 0, 0].T                                       # (Cin, P)
    w2_k = jnp.transpose(w2_fold, (2, 3, 1, 0)).reshape(3, 3 * planes, planes)
    w3_k = w3_fold[:, :, 0, 0].T                                       # (P, Cout)

    params = (w1_k, b1.reshape(1, -1), w2_k, b2.reshape(1, -1),
              w3_k, b3.reshape(1, -1))
    raw = (w1_fold.astype(jnp.float32), w2_fold.astype(jnp.float32),
           w3_fold.astype(jnp.float32), b1, b2, b3)
    return params, raw


# ----------------------------------------------------------------------------
# Plain-JAX reference (lax.conv).  Activations are rounded to bf16 at the same
# points where the kernel stores bf16.
# ----------------------------------------------------------------------------
def bottleneck_reference(x_nchw, raw):
    w1, w2, w3, b1, b2, b3 = raw
    q = lambda t: t.astype(jnp.bfloat16).astype(jnp.float32)
    bc = lambda b: b[None, :, None, None]
    dn = ("NCHW", "OIHW", "NCHW")

    x = jnp.maximum(q(x_nchw), 0.0)
    identity = x
    out = lax.conv_general_dilated(x, w1, (1, 1), "VALID", dimension_numbers=dn)
    out = q(jnp.maximum(out + bc(b1), 0.0))
    out = lax.conv_general_dilated(out, w2, (1, 1), ((1, 1), (1, 1)),
                                   dimension_numbers=dn)
    out = q(jnp.maximum(out + bc(b2), 0.0))
    out = lax.conv_general_dilated(out, w3, (1, 1), "VALID", dimension_numbers=dn)
    return out + bc(b3) + identity


if __name__ == "__main__":
    key = jax.random.PRNGKey(0)
    k_x, k_p = jax.random.split(key)

    # Small but layout-realistic shapes: Cin = Cout = 128 (full lane width),
    # planes = 32, 16x16 spatial, batch 2 (even megacore split on v7x).
    N, H, W = 2, 16, 16
    planes, expansion = 32, 4
    inplanes = planes * expansion                               # 128

    x_nchw = jax.random.normal(k_x, (N, inplanes, H, W), jnp.float32)
    params, raw = make_bottleneck_params(k_p, inplanes, planes, expansion)

    # The kernel is NHWC / bf16 end-to-end; a full network keeps activations in
    # that layout, so this one-time conversion is test-harness glue only.
    x_nhwc = jnp.transpose(x_nchw, (0, 2, 3, 1)).astype(jnp.bfloat16)

    out_nhwc = jax.block_until_ready(bottleneck_pallas(x_nhwc, params))
    ref_nchw = jax.block_until_ready(bottleneck_reference(x_nchw, raw))

    out_f32 = out_nhwc.astype(jnp.float32)
    ref_q = jnp.transpose(ref_nchw, (0, 2, 3, 1)).astype(jnp.bfloat16).astype(
        jnp.float32)

    if not jnp.allclose(out_f32, ref_q, rtol=2e-2, atol=2e-2):
        err = float(jnp.max(jnp.abs(out_f32 - ref_q)))
        raise AssertionError(
            f"Pallas Bottleneck output mismatch vs JAX reference (max abs err {err})")

    print("KERNEL_OK")
</pallas_src>

<mosaic_0001>
module attributes {stable_mosaic.version = 11 : i64} {
  func.func @_bottleneck_kernel(%arg0: i32, %arg1: memref<1x16x16x128xbf16, #tpu.memory_space<vmem>>, %arg2: memref<128x32xbf16, #tpu.memory_space<vmem>>, %arg3: memref<1x32xf32, #tpu.memory_space<vmem>>, %arg4: memref<3x96x32xbf16, #tpu.memory_space<vmem>>, %arg5: memref<1x32xf32, #tpu.memory_space<vmem>>, %arg6: memref<32x128xbf16, #tpu.memory_space<vmem>>, %arg7: memref<1x128xf32, #tpu.memory_space<vmem>>, %arg8: memref<1x16x16x128xbf16, #tpu.memory_space<vmem>>, %arg9: memref<20x24x32xbf16, #tpu.memory_space<vmem>>) attributes {dimension_semantics = [#tpu.dimension_semantics<parallel>], iteration_bounds = array<i64: 2>, scalar_prefetch = 0 : i64, scratch_operands = 1 : i64, tpu.core_type = #tpu.core_type<tc>, window_params = [{transform_indices = @transform_0, window_bounds = array<i64: 1, 16, 16, 128>}, {pipeline_mode = #tpu.pipeline_mode<synchronous>, transform_indices = @transform_1, window_bounds = array<i64: 128, 32>}, {pipeline_mode = #tpu.pipeline_mode<synchronous>, transform_indices = @transform_2, window_bounds = array<i64: 1, 32>}, {pipeline_mode = #tpu.pipeline_mode<synchronous>, transform_indices = @transform_3, window_bounds = array<i64: 3, 96, 32>}, {pipeline_mode = #tpu.pipeline_mode<synchronous>, transform_indices = @transform_4, window_bounds = array<i64: 1, 32>}, {pipeline_mode = #tpu.pipeline_mode<synchronous>, transform_indices = @transform_5, window_bounds = array<i64: 32, 128>}, {pipeline_mode = #tpu.pipeline_mode<synchronous>, transform_indices = @transform_6, window_bounds = array<i64: 1, 128>}, {transform_indices = @transform_7, window_bounds = array<i64: 1, 16, 16, 128>}]} {
    %cst = arith.constant 0.000000e+00 : bf16
    %0 = vector.broadcast %cst : bf16 to vector<20x8x32xbf16>
    %c0 = arith.constant 0 : index
    %c16 = arith.constant 16 : index
    %c0_0 = arith.constant 0 : index
    %1 = vector.load %arg9[%c0, %c16, %c0_0] : memref<20x24x32xbf16, #tpu.memory_space<vmem>>, vector<20x8x32xbf16>
    tpu.vector_store %arg9[%c0, %c16, %c0_0], %0 {strides = array<i32>} : memref<20x24x32xbf16, #tpu.memory_space<vmem>>, vector<20x8x32xbf16>,
    %cst_1 = arith.constant 0.000000e+00 : bf16
    %2 = vector.broadcast %cst_1 : bf16 to vector<2x24x32xbf16>
    %c0_2 = arith.constant 0 : index
    %c0_3 = arith.constant 0 : index
    %c0_4 = arith.constant 0 : index
    %3 = vector.load %arg9[%c0_2, %c0_3, %c0_4] : memref<20x24x32xbf16, #tpu.memory_space<vmem>>, vector<2x24x32xbf16>
    tpu.vector_store %arg9[%c0_2, %c0_3, %c0_4], %2 {strides = array<i32>} : memref<20x24x32xbf16, #tpu.memory_space<vmem>>, vector<2x24x32xbf16>,
    %cst_5 = arith.constant 0.000000e+00 : bf16
    %4 = vector.broadcast %cst_5 : bf16 to vector<2x24x32xbf16>
    %c18 = arith.constant 18 : index
    %c0_6 = arith.constant 0 : index
    %c0_7 = arith.constant 0 : index
    %5 = vector.load %arg9[%c18, %c0_6, %c0_7] : memref<20x24x32xbf16, #tpu.memory_space<vmem>>, vector<2x24x32xbf16>
    tpu.vector_store %arg9[%c18, %c0_6, %c0_7], %4 {strides = array<i32>} : memref<20x24x32xbf16, #tpu.memory_space<vmem>>, vector<2x24x32xbf16>,
    %c0_8 = arith.constant 0 : index
    %c0_9 = arith.constant 0 : index
    %c0_10 = arith.constant 0 : index
    %c0_11 = arith.constant 0 : index
    %6 = vector.load %arg1[%c0_8, %c0_9, %c0_10, %c0_11] : memref<1x16x16x128xbf16, #tpu.memory_space<vmem>>, vector<1x16x16x128xbf16>
    %7 = vector.shape_cast %6 : vector<1x16x16x128xbf16> to vector<16x16x128xbf16>
    %cst_12 = arith.constant 0.000000e+00 : bf16
    %8 = vector.broadcast %cst_12 : bf16 to vector<16x16x128xbf16>
    %9 = arith.maximumf %7, %8 : vector<16x16x128xbf16>
    %10 = vector.shape_cast %9 : vector<16x16x128xbf16> to vector<256x128xbf16>
    %c0_13 = arith.constant 0 : index
    %c0_14 = arith.constant 0 : index
    %11 = vector.load %arg2[%c0_13, %c0_14] : memref<128x32xbf16, #tpu.memory_space<vmem>>, vector<128x32xbf16>
    %cst_15 = arith.constant dense<0.000000e+00> : vector<256x32xf32>
    %12 = tpu.matmul %10, %11, %cst_15 {dimension_numbers = #tpu.dot_dimension_numbers<[1], [0], [0], [1], [0, 0, 1, 1], [], []>} : vector<256x128xbf16>, vector<128x32xbf16>, vector<256x32xf32> -> vector<256x32xf32>
    %c0_16 = arith.constant 0 : index
    %c0_17 = arith.constant 0 : index
    %13 = vector.load %arg3[%c0_16, %c0_17] : memref<1x32xf32, #tpu.memory_space<vmem>>, vector<1x32xf32>
    %14 = vector.broadcast %13 : vector<1x32xf32> to vector<256x32xf32>
    %15 = arith.addf %12, %14 : vector<256x32xf32>
    %cst_18 = arith.constant 0.000000e+00 : f32
    %16 = vector.broadcast %cst_18 : f32 to vector<256x32xf32>
    %17 = arith.maximumf %15, %16 : vector<256x32xf32>
    %18 = arith.truncf %17 : vector<256x32xf32> to vector<256x32xbf16>
    %19 = vector.shape_cast %18 : vector<256x32xbf16> to vector<16x16x32xbf16>
    %c2 = arith.constant 2 : index
    %c0_19 = arith.constant 0 : index
    %c0_20 = arith.constant 0 : index
    %20 = vector.load %arg9[%c2, %c0_19, %c0_20] : memref<20x24x32xbf16, #tpu.memory_space<vmem>>, vector<16x16x32xbf16>
    tpu.vector_store %arg9[%c2, %c0_19, %c0_20], %19 {strides = array<i32>} : memref<20x24x32xbf16, #tpu.memory_space<vmem>>, vector<16x16x32xbf16>,
    %c0_21 = arith.constant 0 : index
    %c0_22 = arith.constant 0 : index
    %c0_23 = arith.constant 0 : index
    %21 = vector.load %arg9[%c0_21, %c0_22, %c0_23] : memref<20x24x32xbf16, #tpu.memory_space<vmem>>, vector<20x24x32xbf16>
    %22 = vector.shape_cast %21 : vector<20x24x32xbf16> to vector<480x32xbf16>
    %23 = vector.extract_strided_slice %22 {offsets = [23, 0], sizes = [432, 32], strides = [1, 1]} : vector<480x32xbf16> to vector<432x32xbf16>
    %24 = vector.extract_strided_slice %22 {offsets = [24, 0], sizes = [432, 32], strides = [1, 1]} : vector<480x32xbf16> to vector<432x32xbf16>
    %25 = vector.extract_strided_slice %22 {offsets = [25, 0], sizes = [432, 32], strides = [1, 1]} : vector<480x32xbf16> to vector<432x32xbf16>
    %26 = tpu.concatenate %23, %24, %25 in 1 : vector<432x32xbf16>, vector<432x32xbf16>, vector<432x32xbf16> -> vector<432x96xbf16>
    %27 = vector.extract_strided_slice %26 {offsets = [0, 0], sizes = [384, 96], strides = [1, 1]} : vector<432x96xbf16> to vector<384x96xbf16>
    %c0_24 = arith.constant 0 : index
    %c0_25 = arith.constant 0 : index
    %c0_26 = arith.constant 0 : index
    %28 = vector.load %arg4[%c0_24, %c0_25, %c0_26] : memref<3x96x32xbf16, #tpu.memory_space<vmem>>, vector<1x96x32xbf16>
    %29 = vector.shape_cast %28 : vector<1x96x32xbf16> to vector<96x32xbf16>
    %cst_27 = arith.constant dense<0.000000e+00> : vector<384x32xf32>
    %30 = tpu.matmul %27, %29, %cst_27 {dimension_numbers = #tpu.dot_dimension_numbers<[1], [0], [0], [1], [0, 0, 1, 1], [], []>} : vector<384x96xbf16>, vector<96x32xbf16>, vector<384x32xf32> -> vector<384x32xf32>
    %31 = vector.extract_strided_slice %26 {offsets = [24, 0], sizes = [384, 96], strides = [1, 1]} : vector<432x96xbf16> to vector<384x96xbf16>
    %c1 = arith.constant 1 : index
    %c0_28 = arith.constant 0 : index
    %c0_29 = arith.constant 0 : index
    %32 = vector.load %arg4[%c1, %c0_28, %c0_29] : memref<3x96x32xbf16, #tpu.memory_space<vmem>>, vector<1x96x32xbf16>
    %33 = vector.shape_cast %32 : vector<1x96x32xbf16> to vector<96x32xbf16>
    %cst_30 = arith.constant dense<0.000000e+00> : vector<384x32xf32>
    %34 = tpu.matmul %31, %33, %cst_30 {dimension_numbers = #tpu.dot_dimension_numbers<[1], [0], [0], [1], [0, 0, 1, 1], [], []>} : vector<384x96xbf16>, vector<96x32xbf16>, vector<384x32xf32> -> vector<384x32xf32>
    %35 = arith.addf %30, %34 : vector<384x32xf32>
    %36 = vector.extract_strided_slice %26 {offsets = [48, 0], sizes = [384, 96], strides = [1, 1]} : vector<432x96xbf16> to vector<384x96xbf16>
    %c2_31 = arith.constant 2 : index
    %c0_32 = arith.constant 0 : index
    %c0_33 = arith.constant 0 : index
    %37 = vector.load %arg4[%c2_31, %c0_32, %c0_33] : memref<3x96x32xbf16, #tpu.memory_space<vmem>>, vector<1x96x32xbf16>
    %38 = vector.shape_cast %37 : vector<1x96x32xbf16> to vector<96x32xbf16>
    %cst_34 = arith.constant dense<0.000000e+00> : vector<384x32xf32>
    %39 = tpu.matmul %36, %38, %cst_34 {dimension_numbers = #tpu.dot_dimension_numbers<[1], [0], [0], [1], [0, 0, 1, 1], [], []>} : vector<384x96xbf16>, vector<96x32xbf16>, vector<384x32xf32> -> vector<384x32xf32>
    %40 = arith.addf %35, %39 : vector<384x32xf32>
    %c0_35 = arith.constant 0 : index
    %c0_36 = arith.constant 0 : index
    %41 = vector.load %arg5[%c0_35, %c0_36] : memref<1x32xf32, #tpu.memory_space<vmem>>, vector<1x32xf32>
    %42 = vector.broadcast %41 : vector<1x32xf32> to vector<384x32xf32>
    %43 = arith.addf %40, %42 : vector<384x32xf32>
    %cst_37 = arith.constant 0.000000e+00 : f32
    %44 = vector.broadcast %cst_37 : f32 to vector<384x32xf32>
    %45 = arith.maximumf %43, %44 : vector<384x32xf32>
    %46 = vector.shape_cast %45 : vector<384x32xf32> to vector<16x24x32xf32>
    %47 = vector.extract_strided_slice %46 {offsets = [0, 0, 0], sizes = [16, 16, 32], strides = [1, 1, 1]} : vector<16x24x32xf32> to vector<16x16x32xf32>
    %48 = vector.shape_cast %47 : vector<16x16x32xf32> to vector<256x32xf32>
    %49 = arith.truncf %48 : vector<256x32xf32> to vector<256x32xbf16>
    %c0_38 = arith.constant 0 : index
    %c0_39 = arith.constant 0 : index
    %50 = vector.load %arg6[%c0_38, %c0_39] : memref<32x128xbf16, #tpu.memory_space<vmem>>, vector<32x128xbf16>
    %cst_40 = arith.constant dense<0.000000e+00> : vector<256x128xf32>
    %51 = tpu.matmul %49, %50, %cst_40 {dimension_numbers = #tpu.dot_dimension_numbers<[1], [0], [0], [1], [0, 0, 1, 1], [], []>} : vector<256x32xbf16>, vector<32x128xbf16>, vector<256x128xf32> -> vector<256x128xf32>
    %c0_41 = arith.constant 0 : index
    %c0_42 = arith.constant 0 : index
    %52 = vector.load %arg7[%c0_41, %c0_42] : memref<1x128xf32, #tpu.memory_space<vmem>>, vector<1x128xf32>
    %53 = vector.broadcast %52 : vector<1x128xf32> to vector<256x128xf32>
    %54 = arith.addf %51, %53 : vector<256x128xf32>
    %55 = vector.shape_cast %54 : vector<256x128xf32> to vector<16x16x128xf32>
    %c0_43 = arith.constant 0 : index
    %c0_44 = arith.constant 0 : index
    %c0_45 = arith.constant 0 : index
    %c0_46 = arith.constant 0 : index
    %56 = vector.load %arg1[%c0_43, %c0_44, %c0_45, %c0_46] : memref<1x16x16x128xbf16, #tpu.memory_space<vmem>>, vector<1x16x16x128xbf16>
    %57 = vector.shape_cast %56 : vector<1x16x16x128xbf16> to vector<16x16x128xbf16>
    %cst_47 = arith.constant 0.000000e+00 : bf16
    %58 = vector.broadcast %cst_47 : bf16 to vector<16x16x128xbf16>
    %59 = arith.maximumf %57, %58 : vector<16x16x128xbf16>
    %60 = arith.extf %59 : vector<16x16x128xbf16> to vector<16x16x128xf32>
    %61 = arith.addf %55, %60 : vector<16x16x128xf32>
    %62 = arith.truncf %61 : vector<16x16x128xf32> to vector<16x16x128xbf16>
    %c0_48 = arith.constant 0 : index
    %c0_49 = arith.constant 0 : index
    %c0_50 = arith.constant 0 : index
    %c0_51 = arith.constant 0 : index
    %63 = vector.load %arg8[%c0_48, %c0_49, %c0_50, %c0_51] : memref<1x16x16x128xbf16, #tpu.memory_space<vmem>>, vector<1x16x16x128xbf16>
    %64 = vector.shape_cast %63 : vector<1x16x16x128xbf16> to vector<16x16x128xbf16>
    %65 = vector.shape_cast %62 : vector<16x16x128xbf16> to vector<1x16x16x128xbf16>
    tpu.vector_store %arg8[%c0_48, %c0_49, %c0_50, %c0_51], %65 {strides = array<i32>} : memref<1x16x16x128xbf16, #tpu.memory_space<vmem>>, vector<1x16x16x128xbf16>,
    return
  }
  func.func @transform_0(%arg0: i32) -> (i32, i32, i32, i32) {
    %c0_i32 = arith.constant 0 : i32
    %c0_i32_0 = arith.constant 0 : i32
    %c0_i32_1 = arith.constant 0 : i32
    %c0_i32_2 = arith.constant 0 : i32
    return %arg0, %c0_i32, %c0_i32_0, %c0_i32_1 : i32, i32, i32, i32
  }
  func.func @transform_1(%arg0: i32) -> (i32, i32) {
    %c0_i32 = arith.constant 0 : i32
    %c0_i32_0 = arith.constant 0 : i32
    %c0_i32_1 = arith.constant 0 : i32
    return %c0_i32, %c0_i32_0 : i32, i32
  }
  func.func @transform_2(%arg0: i32) -> (i32, i32) {
    %c0_i32 = arith.constant 0 : i32
    %c0_i32_0 = arith.constant 0 : i32
    %c0_i32_1 = arith.constant 0 : i32
    return %c0_i32, %c0_i32_0 : i32, i32
  }
  func.func @transform_3(%arg0: i32) -> (i32, i32, i32) {
    %c0_i32 = arith.constant 0 : i32
    %c0_i32_0 = arith.constant 0 : i32
    %c0_i32_1 = arith.constant 0 : i32
    %c0_i32_2 = arith.constant 0 : i32
    return %c0_i32, %c0_i32_0, %c0_i32_1 : i32, i32, i32
  }
  func.func @transform_4(%arg0: i32) -> (i32, i32) {
    %c0_i32 = arith.constant 0 : i32
    %c0_i32_0 = arith.constant 0 : i32
    %c0_i32_1 = arith.constant 0 : i32
    return %c0_i32, %c0_i32_0 : i32, i32
  }
  func.func @transform_5(%arg0: i32) -> (i32, i32) {
    %c0_i32 = arith.constant 0 : i32
    %c0_i32_0 = arith.constant 0 : i32
    %c0_i32_1 = arith.constant 0 : i32
    return %c0_i32, %c0_i32_0 : i32, i32
  }
  func.func @transform_6(%arg0: i32) -> (i32, i32) {
    %c0_i32 = arith.constant 0 : i32
    %c0_i32_0 = arith.constant 0 : i32
    %c0_i32_1 = arith.constant 0 : i32
    return %c0_i32, %c0_i32_0 : i32, i32
  }
  func.func @transform_7(%arg0: i32) -> (i32, i32, i32, i32) {
    %c0_i32 = arith.constant 0 : i32
    %c0_i32_0 = arith.constant 0 : i32
    %c0_i32_1 = arith.constant 0 : i32
    %c0_i32_2 = arith.constant 0 : i32
    return %arg0, %c0_i32, %c0_i32_0, %c0_i32_1 : i32, i32, i32, i32
  }
}

</mosaic_0001>

<llo_original>
// kernel: bottleneck_pallas.1
$region0: #{bottleneck_pallas.1}
  #allocation0 [shape = 'u32[]', space=smem, size = 0x4, offset = 0x4, fixed_abs, tag = 'smem constant byte address 0x4 - core index']
  #allocation1 [shape = 'u32[72,128]{1,0:T(1,128)}', space=vmem, size = 0x9000, scoped, tag = 'internal scratch']
  #allocation2 [shape = 'bf16[20,24,32]{2,1,0:T(8,128)(2,1)}', space=vmem, size = 0x1e000, scoped, tag = 'scratch operand']
  %s0 = inlined_call_operand.hbm [shape: bf16[2,16,16,128], index: 0, kind: input, shape index: {}]
  %s1 = inlined_call_operand.vmem [shape: bf16[128,32], index: 1, kind: input, shape index: {}]
  %s2 = inlined_call_operand.vmem [shape: f32[1,32], index: 2, kind: input, shape index: {}]
  %s3 = inlined_call_operand.vmem [shape: bf16[3,96,32], index: 3, kind: input, shape index: {}]
  %s4 = inlined_call_operand.vmem [shape: f32[1,32], index: 4, kind: input, shape index: {}]
  %s5 = inlined_call_operand.vmem [shape: bf16[32,128], index: 5, kind: input, shape index: {}]
  %s6 = inlined_call_operand.vmem [shape: f32[1,128], index: 6, kind: input, shape index: {}]
  %s7 = inlined_call_operand.hbm [shape: bf16[2,16,16,128], index: 7, kind: output, shape index: {}]
  %s8 = sld [smem:[#allocation0]]
  $region65: #{bottleneck_pallas.1} parent=0
    _
  %s10 = ssub.s32 1, %s8
  %s11 = scalar_select 0, %s10, %s8
  $region1: #{bottleneck_pallas.1} parent=0
    #allocation3 [shape = 'u8[131072]{0}', space=vmem, size = 0x20000, scoped, tag = 'input window, operand 0']
    #allocation4 [shape = 's32[2]{0}', space=sflag, size = 0x8, scoped, tag = 'scoped memory for bottleneck_pallas.1']
    #allocation5 [shape = 's32[2]{0}', space=sflag, size = 0x8, scoped, tag = 'scoped memory for bottleneck_pallas.1']
    #allocation6 [shape = 'u8[131072]{0}', space=vmem, size = 0x20000, scoped, tag = 'output window, operand 0']
    %12 = vsyncpa [#allocation4], 0
    %s13 = scalar_lea.sflag [#allocation4], 1
    %14 = vsyncpa %s13, 0
    %15 = vsyncpa [#allocation5], 0
    %s16 = scalar_lea.sflag [#allocation5], 1
    %17 = vsyncpa %s16, 0
    loop: start=0, step=1, limit=4
    $region2: #{bottleneck_pallas.1} parent=1 // loop_pre_header
      _
    $region3: #{bottleneck_pallas.1} parent=1 // loop_header
      %s19 = sphi 0, %s23
      %p20 = scmp.ge.s32.totalorder %s19, 4
      %s29 = sphi 0, %s31
      %s32 = sphi 0, %s29
      %s33 = sphi 0, %s32
      %s49 = sphi 0, %s33
      %s53 = sphi 0, %s53
      %s55 = sphi 0, %s53
      %s56 = sphi 0, %s55
      %s70 = sphi 0, %s56
      %s74 = sphi 0, %s74
      %s76 = sphi 0, %s74
      %s77 = sphi 0, %s76
      %s91 = sphi 0, %s77
      %s95 = sphi 0, %s95
      %s97 = sphi 0, %s95
      %s98 = sphi 0, %s97
      %s112 = sphi 0, %s98
      %s116 = sphi 0, %s116
      %s118 = sphi 0, %s116
      %s119 = sphi 0, %s118
      %s133 = sphi 0, %s119
      %s137 = sphi 0, %s137
      %s139 = sphi 0, %s137
      %s140 = sphi 0, %s139
      %s154 = sphi 0, %s140
      %s158 = sphi 0, %s158
      %s160 = sphi 0, %s158
      %s161 = sphi 0, %s160
      %s175 = sphi 0, %s161
      %s181 = sphi 0, %s183
      %s184 = sphi 0, %s181
      %s185 = sphi 0, %s184
      %s201 = sphi 0, %s185
    $region4: #{bottleneck_pallas.1} parent=1 // loop_header_branch
      %22 = sbr.rel (%p20) target = $region8
    $region5: #{bottleneck_pallas.1} parent=1 // loop_body
      %s24 = ssub.s32 %s19, 1
      %s25 = ssub.s32 %s19, 2
      %s26 = sadd.s32 %s19, 1
      %s27 = ssub.s32 %s19, %s26
      %p28 = scmp.eq.s32.totalorder %s27, 0
      %s30 = sadd.s32 %s29, 1
      %s31 = scalar_select %p28, %s29, %s30
      %p34 = pneg %p28
      %p35 = scmp.eq.s32.totalorder %s19, 1
      %p36 = por %p34, %p35
      %p37 = scmp.ne.s32.totalorder %s29, %s32
      %p38 = scmp.eq.s32.totalorder %s19, 0
      %p39 = por %p37, %p38
      %p40 = scmp.ne.s32.totalorder %s29, %s32
      %p41 = scmp.eq.s32.totalorder %s24, 1
      %p42 = por %p40, %p41
      %p43 = scmp.ne.s32.totalorder %s32, %s33
      %p44 = scmp.eq.s32.totalorder %s24, 0
      %p45 = por %p43, %p44
      %p46 = scmp.ne.s32.totalorder %s32, %s33
      %p47 = scmp.eq.s32.totalorder %s25, 1
      %p48 = por %p46, %p47
      %p50 = scmp.ne.s32.totalorder %s33, %s49
      %p51 = scmp.eq.s32.totalorder %s25, 0
      %p52 = por %p50, %p51
      %s54 = sadd.s32 %s53, 1
      %p57 = scmp.eq.s32.totalorder %s19, 1
      %p58 = scmp.ne.s32.totalorder %s53, %s55
      %p59 = scmp.eq.s32.totalorder %s19, 0
      %p60 = por %p58, %p59
      %p61 = scmp.ne.s32.totalorder %s53, %s55
      %p62 = scmp.eq.s32.totalorder %s24, 1
      %p63 = por %p61, %p62
      %p64 = scmp.ne.s32.totalorder %s55, %s56
      %p65 = scmp.eq.s32.totalorder %s24, 0
      %p66 = por %p64, %p65
      %p67 = scmp.ne.s32.totalorder %s55, %s56
      %p68 = scmp.eq.s32.totalorder %s25, 1
      %p69 = por %p67, %p68
      %p71 = scmp.ne.s32.totalorder %s56, %s70
      %p72 = scmp.eq.s32.totalorder %s25, 0
      %p73 = por %p71, %p72
      %s75 = sadd.s32 %s74, 1
      %p78 = scmp.eq.s32.totalorder %s19, 1
      %p79 = scmp.ne.s32.totalorder %s74, %s76
      %p80 = scmp.eq.s32.totalorder %s19, 0
      %p81 = por %p79, %p80
      %p82 = scmp.ne.s32.totalorder %s74, %s76
      %p83 = scmp.eq.s32.totalorder %s24, 1
      %p84 = por %p82, %p83
      %p85 = scmp.ne.s32.totalorder %s76, %s77
      %p86 = scmp.eq.s32.totalorder %s24, 0
      %p87 = por %p85, %p86
      %p88 = scmp.ne.s32.totalorder %s76, %s77
      %p89 = scmp.eq.s32.totalorder %s25, 1
      %p90 = por %p88, %p89
      %p92 = scmp.ne.s32.totalorder %s77, %s91
      %p93 = scmp.eq.s32.totalorder %s25, 0
      %p94 = por %p92, %p93
      %s96 = sadd.s32 %s95, 1
      %p99 = scmp.eq.s32.totalorder %s19, 1
      %p100 = scmp.ne.s32.totalorder %s95, %s97
      %p101 = scmp.eq.s32.totalorder %s19, 0
      %p102 = por %p100, %p101
      %p103 = scmp.ne.s32.totalorder %s95, %s97
      %p104 = scmp.eq.s32.totalorder %s24, 1
      %p105 = por %p103, %p104
      %p106 = scmp.ne.s32.totalorder %s97, %s98
      %p107 = scmp.eq.s32.totalorder %s24, 0
      %p108 = por %p106, %p107
      %p109 = scmp.ne.s32.totalorder %s97, %s98
      %p110 = scmp.eq.s32.totalorder %s25, 1
      %p111 = por %p109, %p110
      %p113 = scmp.ne.s32.totalorder %s98, %s112
      %p114 = scmp.eq.s32.totalorder %s25, 0
      %p115 = por %p113, %p114
      %s117 = sadd.s32 %s116, 1
      %p120 = scmp.eq.s32.totalorder %s19, 1
      %p121 = scmp.ne.s32.totalorder %s116, %s118
      %p122 = scmp.eq.s32.totalorder %s19, 0
      %p123 = por %p121, %p122
      %p124 = scmp.ne.s32.totalorder %s116, %s118
      %p125 = scmp.eq.s32.totalorder %s24, 1
      %p126 = por %p124, %p125
      %p127 = scmp.ne.s32.totalorder %s118, %s119
      %p128 = scmp.eq.s32.totalorder %s24, 0
      %p129 = por %p127, %p128
      %p130 = scmp.ne.s32.totalorder %s118, %s119
      %p131 = scmp.eq.s32.totalorder %s25, 1
      %p132 = por %p130, %p131
      %p134 = scmp.ne.s32.totalorder %s119, %s133
      %p135 = scmp.eq.s32.totalorder %s25, 0
      %p136 = por %p134, %p135
      %s138 = sadd.s32 %s137, 1
      %p141 = scmp.eq.s32.totalorder %s19, 1
      %p142 = scmp.ne.s32.totalorder %s137, %s139
      %p143 = scmp.eq.s32.totalorder %s19, 0
      %p144 = por %p142, %p143
      %p145 = scmp.ne.s32.totalorder %s137, %s139
      %p146 = scmp.eq.s32.totalorder %s24, 1
      %p147 = por %p145, %p146
      %p148 = scmp.ne.s32.totalorder %s139, %s140
      %p149 = scmp.eq.s32.totalorder %s24, 0
      %p150 = por %p148, %p149
      %p151 = scmp.ne.s32.totalorder %s139, %s140
      %p152 = scmp.eq.s32.totalorder %s25, 1
      %p153 = por %p151, %p152
      %p155 = scmp.ne.s32.totalorder %s140, %s154
      %p156 = scmp.eq.s32.totalorder %s25, 0
      %p157 = por %p155, %p156
      %s159 = sadd.s32 %s158, 1
      %p162 = scmp.eq.s32.totalorder %s19, 1
      %p163 = scmp.ne.s32.totalorder %s158, %s160
      %p164 = scmp.eq.s32.totalorder %s19, 0
      %p165 = por %p163, %p164
      %p166 = scmp.ne.s32.totalorder %s158, %s160
      %p167 = scmp.eq.s32.totalorder %s24, 1
      %p168 = por %p166, %p167
      %p169 = scmp.ne.s32.totalorder %s160, %s161
      %p170 = scmp.eq.s32.totalorder %s24, 0
      %p171 = por %p169, %p170
      %p172 = scmp.ne.s32.totalorder %s160, %s161
      %p173 = scmp.eq.s32.totalorder %s25, 1
      %p174 = por %p172, %p173
      %p176 = scmp.ne.s32.totalorder %s161, %s175
      %p177 = scmp.eq.s32.totalorder %s25, 0
      %p178 = por %p176, %p177
      %s179 = ssub.s32 %s19, %s26
      %p180 = scmp.eq.s32.totalorder %s179, 0
      %s182 = sadd.s32 %s181, 1
      %s183 = scalar_select %p180, %s181, %s182
      %p186 = pneg %p180
      %p187 = scmp.eq.s32.totalorder %s19, 1
      %p188 = por %p186, %p187
      %p189 = scmp.ne.s32.totalorder %s181, %s184
      %p190 = scmp.eq.s32.totalorder %s19, 0
      %p191 = por %p189, %p190
      %p192 = scmp.ne.s32.totalorder %s181, %s184
      %p193 = scmp.eq.s32.totalorder %s24, 1
      %p194 = por %p192, %p193
      %p195 = scmp.ne.s32.totalorder %s184, %s185
      %p196 = scmp.eq.s32.totalorder %s24, 0
      %p197 = por %p195, %p196
      %p198 = scmp.ne.s32.totalorder %s184, %s185
      %p199 = scmp.eq.s32.totalorder %s25, 1
      %p200 = por %p198, %p199
      %p202 = scmp.ne.s32.totalorder %s185, %s201
      %p203 = scmp.eq.s32.totalorder %s25, 0
      %p204 = por %p202, %p203
      %p205 = scmp.le.s32.totalorder 1, %s19
      %p206 = scmp.lt.s32.totalorder %s19, 3
      %p207 = pnand %p205, %p206
      %p208 = pneg %p207
      // Predicated region
      $region9: #{bottleneck_pallas.1} parent=5 // pred_check
        _
      $region10: #{bottleneck_pallas.1} parent=5 // pred_check_branch
        %210 = sbr.rel (%p207) target = $region12
      $region11: #{bottleneck_pallas.1} parent=5 // pred_region
        %s211 = ssub.s32 %s19, 1
        // Predicated region
        $region13: #{bottleneck_pallas.1} parent=11 // pred_check
          %p212 = pneg %p66
        $region14: #{bottleneck_pallas.1} parent=11 // pred_check_branch
          %214 = sbr.rel (%p212) target = $region16
        $region15: #{bottleneck_pallas.1} parent=11 // pred_region
          _
        $region16: #{bottleneck_pallas.1} parent=11 // pred_fallthru
          _
        // Predicated region
        $region17: #{bottleneck_pallas.1} parent=11 // pred_check
          %p215 = pneg %p87
        $region18: #{bottleneck_pallas.1} parent=11 // pred_check_branch
          %217 = sbr.rel (%p215) target = $region20
        $region19: #{bottleneck_pallas.1} parent=11 // pred_region
          _
        $region20: #{bottleneck_pallas.1} parent=11 // pred_fallthru
          _
        // Predicated region
        $region21: #{bottleneck_pallas.1} parent=11 // pred_check
          %p218 = pneg %p108
        $region22: #{bottleneck_pallas.1} parent=11 // pred_check_branch
          %220 = sbr.rel (%p218) target = $region24
        $region23: #{bottleneck_pallas.1} parent=11 // pred_region
          _
        $region24: #{bottleneck_pallas.1} parent=11 // pred_fallthru
          _
        // Predicated region
        $region25: #{bottleneck_pallas.1} parent=11 // pred_check
          %p221 = pneg %p129
        $region26: #{bottleneck_pallas.1} parent=11 // pred_check_branch
          %223 = sbr.rel (%p221) target = $region28
        $region27: #{bottleneck_pallas.1} parent=11 // pred_region
          _
        $region28: #{bottleneck_pallas.1} parent=11 // pred_fallthru
          _
        // Predicated region
        $region29: #{bottleneck_pallas.1} parent=11 // pred_check
          %p224 = pneg %p150
        $region30: #{bottleneck_pallas.1} parent=11 // pred_check_branch
          %226 = sbr.rel (%p224) target = $region32
        $region31: #{bottleneck_pallas.1} parent=11 // pred_region
          _
        $region32: #{bottleneck_pallas.1} parent=11 // pred_fallthru
          _
        // Predicated region
        $region33: #{bottleneck_pallas.1} parent=11 // pred_check
          %p227 = pneg %p171
        $region34: #{bottleneck_pallas.1} parent=11 // pred_check_branch
          %229 = sbr.rel (%p227) target = $region36
        $region35: #{bottleneck_pallas.1} parent=11 // pred_region
          _
        $region36: #{bottleneck_pallas.1} parent=11 // pred_fallthru
          _
      $region12: #{bottleneck_pallas.1} parent=5 // pred_fallthru
        _
      %p230 = scmp.lt.s32.totalorder %s19, 2
      // Predicated region
      $region37: #{bottleneck_pallas.1} parent=5 // pred_check
        %p231 = pneg %p230
      $region38: #{bottleneck_pallas.1} parent=5 // pred_check_branch
        %233 = sbr.rel (%p231) target = $region40
      $region39: #{bottleneck_pallas.1} parent=5 // pred_region
        // Predicated region
        $region41: #{bottleneck_pallas.1} parent=39 // pred_check
          %p234 = pneg %p39
        $region42: #{bottleneck_pallas.1} parent=39 // pred_check_branch
          %236 = sbr.rel (%p234) target = $region44
        $region43: #{bottleneck_pallas.1} parent=39 // pred_region
          %s237 = sand.u32 %s29, 1
          %s238 = scalar_lea.sflag [#allocation4], %s237
          %s239 = sand.u32 %s29, 1
          %s240 = smul.addr %s239, 128
          %s241 = scalar_lea.vmem [#allocation3], %s240
          %243 = vsyncadd %s238, 0
          %s244 = smul.addr %s19, 32
          %s245 = smul.addr %s244, 4
          %s246 = scalar_lea.hbm %s0, %s245
          %s247 = sshll.u32 %s246, 4
          %s248 = int_to_ptr.hbm [resolvable:$true] %s247
          %s249 = sshll.u32 %s241, 4
          %s250 = int_to_ptr.vmem [resolvable:$true] %s249
          %255 = dma.hbm_to_vmem [thread:$0]  %s248, 2048, %s250, %s238, 64, 64, 4
        $region44: #{bottleneck_pallas.1} parent=39 // pred_fallthru
          _
      $region40: #{bottleneck_pallas.1} parent=5 // pred_fallthru
        _
      %p256 = scmp.le.s32.totalorder 1, %s19
      %p257 = scmp.lt.s32.totalorder %s19, 3
      %p258 = pnand %p256, %p257
      %p259 = pneg %p258
      // Predicated region
      $region45: #{bottleneck_pallas.1} parent=5 // pred_check
        _
      $region46: #{bottleneck_pallas.1} parent=5 // pred_check_branch
        %261 = sbr.rel (%p258) target = $region48
      $region47: #{bottleneck_pallas.1} parent=5 // pred_region
        %s262 = ssub.s32 %s19, 1
        %s263 = sand.u32 %s32, 1
        %s264 = scalar_lea.sflag [#allocation4], %s263
        %s265 = sand.u32 %s32, 1
        %s266 = smul.addr %s265, 128
        %s267 = scalar_lea.vmem [#allocation3], %s266
        // Predicated region
        $region49: #{bottleneck_pallas.1} parent=47 // pred_check
          %p268 = pneg %p45
        $region50: #{bottleneck_pallas.1} parent=47 // pred_check_branch
          %270 = sbr.rel (%p268) target = $region52
        $region51: #{bottleneck_pallas.1} parent=47 // pred_region
          %272 = dma.done %s264, 2048
        $region52: #{bottleneck_pallas.1} parent=47 // pred_fallthru
          _
        %s273 = sand.u32 %s32, 1
        %s274 = scalar_lea.sflag [#allocation4], %s273
        %s275 = sand.u32 %s32, 1
        %s276 = smul.addr %s275, 128
        %s277 = scalar_lea.vmem [#allocation3], %s276
        %p278 = pneg %p45
        %p279 = pneg %p42
        %p280 = pneg %p66
        %p281 = pneg %p63
        %p282 = pneg %p87
        %p283 = pneg %p84
        %p284 = pneg %p108
        %p285 = pneg %p105
        %p286 = pneg %p129
        %p287 = pneg %p126
        %p288 = pneg %p150
        %p289 = pneg %p147
        %p290 = pneg %p171
        %p291 = pneg %p168
        %p292 = pneg %p197
        %p293 = pneg %p194
        %s294 = sand.u32 %s184, 1
        %s295 = scalar_lea.sflag [#allocation5], %s294
        %s296 = sand.u32 %s184, 1
        %s297 = smul.addr %s296, 128
        %s298 = scalar_lea.vmem [#allocation6], %s297
        %vm300 = vcmask 257024
        %301 = vst.msk [vmem:[#allocation2 + $0x8] sm:$0xf] %vm300, 0
        %302 = vst.msk [vmem:[#allocation2 + $0x14] sm:$0xf] %vm300, 0
        %303 = vst.msk [vmem:[#allocation2 + $0x20] sm:$0xf] %vm300, 0
        %304 = vst.msk [vmem:[#allocation2 + $0x2c] sm:$0xf] %vm300, 0
        %305 = vst.msk [vmem:[#allocation2 + $0x38] sm:$0xf] %vm300, 0
        %306 = vst.msk [vmem:[#allocation2 + $0x44] sm:$0xf] %vm300, 0
        %307 = vst.msk [vmem:[#allocation2 + $0x50] sm:$0xf] %vm300, 0
        %308 = vst.msk [vmem:[#allocation2 + $0x5c] sm:$0xf] %vm300, 0
        %309 = vst.msk [vmem:[#allocation2 + $0x68] sm:$0xf] %vm300, 0
        %310 = vst.msk [vmem:[#allocation2 + $0x74] sm:$0xf] %vm300, 0
        %311 = vst.msk [vmem:[#allocation2 + $0x80] sm:$0xf] %vm300, 0
        %312 = vst.msk [vmem:[#allocation2 + $0x8c] sm:$0xf] %vm300, 0
        %313 = vst.msk [vmem:[#allocation2 + $0x98] sm:$0xf] %vm300, 0
        %314 = vst.msk [vmem:[#allocation2 + $0xa4] sm:$0xf] %vm300, 0
        %315 = vst.msk [vmem:[#allocation2 + $0xb0] sm:$0xf] %vm300, 0
        %316 = vst.msk [vmem:[#allocation2 + $0xbc] sm:$0xf] %vm300, 0
        %317 = vst.msk [vmem:[#allocation2 + $0xc8] sm:$0xf] %vm300, 0
        %318 = vst.msk [vmem:[#allocation2 + $0xd4] sm:$0xf] %vm300, 0
        %319 = vst.msk [vmem:[#allocation2 + $0xe0] sm:$0xf] %vm300, 0
        %320 = vst.msk [vmem:[#allocation2 + $0xec] sm:$0xf] %vm300, 0
        %321 = vst.msk [vmem:[#allocation2] sm:$0xf] %vm300, 0
        %322 = vst.msk [vmem:[#allocation2 + $0x4] sm:$0xf] %vm300, 0
        %323 = vst.msk [vmem:[#allocation2 + $0x8] sm:$0xf] %vm300, 0
        %324 = vst.msk [vmem:[#allocation2 + $0xc] sm:$0xf] %vm300, 0
        %325 = vst.msk [vmem:[#allocation2 + $0x10] sm:$0xf] %vm300, 0
        %326 = vst.msk [vmem:[#allocation2 + $0x14] sm:$0xf] %vm300, 0
        %s327 = scalar_lea.vmem [#allocation2], 216
        %328 = vst.msk [vmem:[%s327] sm:$0xf] %vm300, 0
        %329 = vst.msk [vmem:[%s327 + $0x4] sm:$0xf] %vm300, 0
        %330 = vst.msk [vmem:[%s327 + $0x8] sm:$0xf] %vm300, 0
        %331 = vst.msk [vmem:[%s327 + $0xc] sm:$0xf] %vm300, 0
        %332 = vst.msk [vmem:[%s327 + $0x10] sm:$0xf] %vm300, 0
        %333 = vst.msk [vmem:[%s327 + $0x14] sm:$0xf] %vm300, 0
        %v334 = vld [vmem:[%s267] sm:$0xf]
        %v335 = vld [vmem:[%s267 + $0x4] sm:$0xf]
        %v336 = vld [vmem:[%s267 + $0x8] sm:$0xf]
        %v337 = vld [vmem:[%s267 + $0xc] sm:$0xf]
        %v338 = vld [vmem:[%s267 + $0x10] sm:$0xf]
        %v339 = vld [vmem:[%s267 + $0x14] sm:$0xf]
        %v340 = vld [vmem:[%s267 + $0x18] sm:$0xf]
        %v341 = vld [vmem:[%s267 + $0x1c] sm:$0xf]
        %v342 = vld [vmem:[%s267 + $0x20] sm:$0xf]
        %v343 = vld [vmem:[%s267 + $0x24] sm:$0xf]
        %v344 = vld [vmem:[%s267 + $0x28] sm:$0xf]
        %v345 = vld [vmem:[%s267 + $0x2c] sm:$0xf]
        %v346 = vld [vmem:[%s267 + $0x30] sm:$0xf]
        %v347 = vld [vmem:[%s267 + $0x34] sm:$0xf]
        %v348 = vld [vmem:[%s267 + $0x38] sm:$0xf]
        %v349 = vld [vmem:[%s267 + $0x3c] sm:$0xf]
        %v350 = vld [vmem:[%s267 + $0x40] sm:$0xf]
        %v351 = vld [vmem:[%s267 + $0x44] sm:$0xf]
        %v352 = vld [vmem:[%s267 + $0x48] sm:$0xf]
        %v353 = vld [vmem:[%s267 + $0x4c] sm:$0xf]
        %v354 = vld [vmem:[%s267 + $0x50] sm:$0xf]
        %v355 = vld [vmem:[%s267 + $0x54] sm:$0xf]
        %v356 = vld [vmem:[%s267 + $0x58] sm:$0xf]
        %v357 = vld [vmem:[%s267 + $0x5c] sm:$0xf]
        %v358 = vld [vmem:[%s267 + $0x60] sm:$0xf]
        %v359 = vld [vmem:[%s267 + $0x64] sm:$0xf]
        %v360 = vld [vmem:[%s267 + $0x68] sm:$0xf]
        %v361 = vld [vmem:[%s267 + $0x6c] sm:$0xf]
        %v362 = vld [vmem:[%s267 + $0x70] sm:$0xf]
        %v363 = vld [vmem:[%s267 + $0x74] sm:$0xf]
        %v364 = vld [vmem:[%s267 + $0x78] sm:$0xf]
        %v365 = vld [vmem:[%s267 + $0x7c] sm:$0xf]
        %v366 = vunpack.c.l.bf16 %v334
        %v367 = vunpack.c.l.bf16 %v335
        %v368 = vunpack.c.l.bf16 %v336
        %v369 = vunpack.c.l.bf16 %v337
        %v370 = vunpack.c.l.bf16 %v338
        %v371 = vunpack.c.l.bf16 %v339
        %v372 = vunpack.c.l.bf16 %v340
        %v373 = vunpack.c.l.bf16 %v341
        %v374 = vunpack.c.l.bf16 %v342
        %v375 = vunpack.c.l.bf16 %v343
        %v376 = vunpack.c.l.bf16 %v344
        %v377 = vunpack.c.l.bf16 %v345
        %v378 = vunpack.c.l.bf16 %v346
        %v379 = vunpack.c.l.bf16 %v347
        %v380 = vunpack.c.l.bf16 %v348
        %v381 = vunpack.c.l.bf16 %v349
        %v382 = vunpack.c.l.bf16 %v350
        %v383 = vunpack.c.l.bf16 %v351
        %v384 = vunpack.c.l.bf16 %v352
        %v385 = vunpack.c.l.bf16 %v353
        %v386 = vunpack.c.l.bf16 %v354
        %v387 = vunpack.c.l.bf16 %v355
        %v388 = vunpack.c.l.bf16 %v356
        %v389 = vunpack.c.l.bf16 %v357
        %v390 = vunpack.c.l.bf16 %v358
        %v391 = vunpack.c.l.bf16 %v359
        %v392 = vunpack.c.l.bf16 %v360
        %v393 = vunpack.c.l.bf16 %v361
        %v394 = vunpack.c.l.bf16 %v362
        %v395 = vunpack.c.l.bf16 %v363
        %v396 = vunpack.c.l.bf16 %v364
        %v397 = vunpack.c.l.bf16 %v365
        %v398 = vmax.f32 %v366, 0.0
        %v399 = vmax.f32 %v367, 0.0
        %v400 = vmax.f32 %v368, 0.0
        %v401 = vmax.f32 %v369, 0.0
        %v402 = vmax.f32 %v370, 0.0
        %v403 = vmax.f32 %v371, 0.0
        %v404 = vmax.f32 %v372, 0.0
        %v405 = vmax.f32 %v373, 0.0
        %v406 = vmax.f32 %v374, 0.0
        %v407 = vmax.f32 %v375, 0.0
        %v408 = vmax.f32 %v376, 0.0
        %v409 = vmax.f32 %v377, 0.0
        %v410 = vmax.f32 %v378, 0.0
        %v411 = vmax.f32 %v379, 0.0
        %v412 = vmax.f32 %v380, 0.0
        %v413 = vmax.f32 %v381, 0.0
        %v414 = vmax.f32 %v382, 0.0
        %v415 = vmax.f32 %v383, 0.0
        %v416 = vmax.f32 %v384, 0.0
        %v417 = vmax.f32 %v385, 0.0
        %v418 = vmax.f32 %v386, 0.0
        %v419 = vmax.f32 %v387, 0.0
        %v420 = vmax.f32 %v388, 0.0
        %v421 = vmax.f32 %v389, 0.0
        %v422 = vmax.f32 %v390, 0.0
        %v423 = vmax.f32 %v391, 0.0
        %v424 = vmax.f32 %v392, 0.0
        %v425 = vmax.f32 %v393, 0.0
        %v426 = vmax.f32 %v394, 0.0
        %v427 = vmax.f32 %v395, 0.0
        %v428 = vmax.f32 %v396, 0.0
        %v429 = vmax.f32 %v397, 0.0
        %v430 = vpack.c.bf16 %v398, %v398
        %v431 = vpack.c.bf16 %v399, %v399
        %v432 = vpack.c.bf16 %v400, %v400
        %v433 = vpack.c.bf16 %v401, %v401
        %v434 = vpack.c.bf16 %v402, %v402
        %v435 = vpack.c.bf16 %v403, %v403
        %v436 = vpack.c.bf16 %v404, %v404
        %v437 = vpack.c.bf16 %v405, %v405
        %v438 = vpack.c.bf16 %v406, %v406
        %v439 = vpack.c.bf16 %v407, %v407
        %v440 = vpack.c.bf16 %v408, %v408
        %v441 = vpack.c.bf16 %v409, %v409
        %v442 = vpack.c.bf16 %v410, %v410
        %v443 = vpack.c.bf16 %v411, %v411
        %v444 = vpack.c.bf16 %v412, %v412
        %v445 = vpack.c.bf16 %v413, %v413
        %v446 = vpack.c.bf16 %v414, %v414
        %v447 = vpack.c.bf16 %v415, %v415
        %v448 = vpack.c.bf16 %v416, %v416
        %v449 = vpack.c.bf16 %v417, %v417
        %v450 = vpack.c.bf16 %v418, %v418
        %v451 = vpack.c.bf16 %v419, %v419
        %v452 = vpack.c.bf16 %v420, %v420
        %v453 = vpack.c.bf16 %v421, %v421
        %v454 = vpack.c.bf16 %v422, %v422
        %v455 = vpack.c.bf16 %v423, %v423
        %v456 = vpack.c.bf16 %v424, %v424
        %v457 = vpack.c.bf16 %v425, %v425
        %v458 = vpack.c.bf16 %v426, %v426
        %v459 = vpack.c.bf16 %v427, %v427
        %v460 = vpack.c.bf16 %v428, %v428
        %v461 = vpack.c.bf16 %v429, %v429
        %v462 = vld [vmem:[%s1] sm:$0xf]
        %v463 = vld [vmem:[%s1 + $0x4] sm:$0xf]
        %v464 = vld [vmem:[%s1 + $0x8] sm:$0xf]
        %v465 = vld [vmem:[%s1 + $0xc] sm:$0xf]
        %v466 = vld [vmem:[%s1 + $0x10] sm:$0xf]
        %v467 = vld [vmem:[%s1 + $0x14] sm:$0xf]
        %v468 = vld [vmem:[%s1 + $0x18] sm:$0xf]
        %v469 = vld [vmem:[%s1 + $0x1c] sm:$0xf]
        %v470 = vld [vmem:[%s1 + $0x20] sm:$0xf]
        %v471 = vld [vmem:[%s1 + $0x24] sm:$0xf]
        %v472 = vld [vmem:[%s1 + $0x28] sm:$0xf]
        %v473 = vld [vmem:[%s1 + $0x2c] sm:$0xf]
        %v474 = vld [vmem:[%s1 + $0x30] sm:$0xf]
        %v475 = vld [vmem:[%s1 + $0x34] sm:$0xf]
        %v476 = vld [vmem:[%s1 + $0x38] sm:$0xf]
        %v477 = vld [vmem:[%s1 + $0x3c] sm:$0xf]
        %v478 = vld [vmem:[%s2] sm:$0x1]
        %v480 = vperm.slane %v478, 0
        %v514 = vunpack.c.l.b16 %v430
        %v515 = vunpack.c.l.b16 %v431
        %v516 = vunpack.c.l.b16 %v432
        %v517 = vunpack.c.l.b16 %v433
        %v518 = vunpack.c.l.b16 %v434
        %v519 = vunpack.c.l.b16 %v435
        %v520 = vunpack.c.l.b16 %v436
        %v521 = vunpack.c.l.b16 %v437
        %v522 = vunpack.c.l.b16 %v438
        %v523 = vunpack.c.l.b16 %v439
        %v524 = vunpack.c.l.b16 %v440
        %v525 = vunpack.c.l.b16 %v441
        %v526 = vunpack.c.l.b16 %v442
        %v527 = vunpack.c.l.b16 %v443
        %v528 = vunpack.c.l.b16 %v444
        %v529 = vunpack.c.l.b16 %v445
        %v530 = vunpack.c.l.b16 %v446
        %v531 = vunpack.c.l.b16 %v447
        %v532 = vunpack.c.l.b16 %v448
        %v533 = vunpack.c.l.b16 %v449
        %v534 = vunpack.c.l.b16 %v450
        %v535 = vunpack.c.l.b16 %v451
        %v536 = vunpack.c.l.b16 %v452
        %v537 = vunpack.c.l.b16 %v453
        %v538 = vunpack.c.l.b16 %v454
        %v539 = vunpack.c.l.b16 %v455
        %v540 = vunpack.c.l.b16 %v456
        %v541 = vunpack.c.l.b16 %v457
        %v542 = vunpack.c.l.b16 %v458
        %v543 = vunpack.c.l.b16 %v459
        %v544 = vunpack.c.l.b16 %v460
        %v545 = vunpack.c.l.b16 %v461
        %v546 = vpack.c.b16 %v515, %v514
        %v547 = vpack.c.b16 %v517, %v516
        %v548 = vpack.c.b16 %v519, %v518
        %v549 = vpack.c.b16 %v521, %v520
        %v550 = vpack.c.b16 %v523, %v522
        %v551 = vpack.c.b16 %v525, %v524
        %v552 = vpack.c.b16 %v527, %v526
        %v553 = vpack.c.b16 %v529, %v528
        %v554 = vpack.c.b16 %v531, %v530
        %v555 = vpack.c.b16 %v533, %v532
        %v556 = vpack.c.b16 %v535, %v534
        %v557 = vpack.c.b16 %v537, %v536
        %v558 = vpack.c.b16 %v539, %v538
        %v559 = vpack.c.b16 %v541, %v540
        %v560 = vpack.c.b16 %v543, %v542
        %v561 = vpack.c.b16 %v545, %v544
        %v594 = vunpack.c.l.b16 %v462
        %v595 = vunpack.c.l.b16 %v463
        %v596 = vunpack.c.l.b16 %v464
        %v597 = vunpack.c.l.b16 %v465
        %v598 = vunpack.c.l.b16 %v466
        %v599 = vunpack.c.l.b16 %v467
        %v600 = vunpack.c.l.b16 %v468
        %v601 = vunpack.c.l.b16 %v469
        %v602 = vunpack.c.l.b16 %v470
        %v603 = vunpack.c.l.b16 %v471
        %v604 = vunpack.c.l.b16 %v472
        %v605 = vunpack.c.l.b16 %v473
        %v606 = vunpack.c.l.b16 %v474
        %v607 = vunpack.c.l.b16 %v475
        %v608 = vunpack.c.l.b16 %v476
        %v609 = vunpack.c.l.b16 %v477
        %v610 = vpack.c.b16 %v595, %v594
        %v611 = vpack.c.b16 %v597, %v596
        %v612 = vpack.c.b16 %v599, %v598
        %v613 = vpack.c.b16 %v601, %v600
        %v614 = vpack.c.b16 %v603, %v602
        %v615 = vpack.c.b16 %v605, %v604
        %v616 = vpack.c.b16 %v607, %v606
        %v617 = vpack.c.b16 %v609, %v608
        %626 = vmatpush.bf16.msra.mxu0 %v617
        %627 = vmatpush.bf16.msra.mxu0 %v616
        %628 = vmatpush.bf16.msra.mxu0 %v615
        %629 = vmatpush.bf16.msra.mxu0 %v614
        %630 = vmatpush.bf16.msra.mxu0 %v613
        %631 = vmatpush.bf16.msra.mxu0 %v612
        %632 = vmatpush.bf16.msra.mxu0 %v611
        %633 = vmatpush.bf16.msra.mxu0 %v610
        %634 = vmatmul.bf16.gmra.mxu0 %v546
        %v635 = vpop.f32.mrf.mxu0
        %v636 = vadd.f32 %v480, %v635
        %v637 = vpop.f32.mrf.mxu0
        %v638 = vadd.f32 %v480, %v637
        %639 = vmatmul.bf16.gmra.mxu0 %v547
        %v640 = vpop.f32.mrf.mxu0
        %v641 = vadd.f32 %v480, %v640
        %v642 = vpop.f32.mrf.mxu0
        %v643 = vadd.f32 %v480, %v642
        %644 = vmatmul.bf16.gmra.mxu0 %v548
        %v645 = vpop.f32.mrf.mxu0
        %v646 = vadd.f32 %v480, %v645
        %v647 = vpop.f32.mrf.mxu0
        %v648 = vadd.f32 %v480, %v647
        %649 = vmatmul.bf16.gmra.mxu0 %v549
        %v650 = vpop.f32.mrf.mxu0
        %v651 = vadd.f32 %v480, %v650
        %v652 = vpop.f32.mrf.mxu0
        %v653 = vadd.f32 %v480, %v652
        %654 = vmatmul.bf16.gmra.mxu0 %v550
        %v655 = vpop.f32.mrf.mxu0
        %v656 = vadd.f32 %v480, %v655
        %v657 = vpop.f32.mrf.mxu0
        %v658 = vadd.f32 %v480, %v657
        %659 = vmatmul.bf16.gmra.mxu0 %v551
        %v660 = vpop.f32.mrf.mxu0
        %v661 = vadd.f32 %v480, %v660
        %v662 = vpop.f32.mrf.mxu0
        %v663 = vadd.f32 %v480, %v662
        %664 = vmatmul.bf16.gmra.mxu0 %v552
        %v665 = vpop.f32.mrf.mxu0
        %v666 = vadd.f32 %v480, %v665
        %v667 = vpop.f32.mrf.mxu0
        %v668 = vadd.f32 %v480, %v667
        %669 = vmatmul.bf16.gmra.mxu0 %v553
        %v670 = vpop.f32.mrf.mxu0
        %v671 = vadd.f32 %v480, %v670
        %v672 = vpop.f32.mrf.mxu0
        %v673 = vadd.f32 %v480, %v672
        %674 = vmatmul.bf16.gmra.mxu0 %v554
        %v675 = vpop.f32.mrf.mxu0
        %v676 = vadd.f32 %v480, %v675
        %v677 = vpop.f32.mrf.mxu0
        %v678 = vadd.f32 %v480, %v677
        %679 = vmatmul.bf16.gmra.mxu0 %v555
        %v680 = vpop.f32.mrf.mxu0
        %v681 = vadd.f32 %v480, %v680
        %v682 = vpop.f32.mrf.mxu0
        %v683 = vadd.f32 %v480, %v682
        %684 = vmatmul.bf16.gmra.mxu0 %v556
        %v685 = vpop.f32.mrf.mxu0
        %v686 = vadd.f32 %v480, %v685
        %v687 = vpop.f32.mrf.mxu0
        %v688 = vadd.f32 %v480, %v687
        %689 = vmatmul.bf16.gmra.mxu0 %v557
        %v690 = vpop.f32.mrf.mxu0
        %v691 = vadd.f32 %v480, %v690
        %v692 = vpop.f32.mrf.mxu0
        %v693 = vadd.f32 %v480, %v692
        %694 = vmatmul.bf16.gmra.mxu0 %v558
        %v695 = vpop.f32.mrf.mxu0
        %v696 = vadd.f32 %v480, %v695
        %v697 = vpop.f32.mrf.mxu0
        %v698 = vadd.f32 %v480, %v697
        %699 = vmatmul.bf16.gmra.mxu0 %v559
        %v700 = vpop.f32.mrf.mxu0
        %v701 = vadd.f32 %v480, %v700
        %v702 = vpop.f32.mrf.mxu0
        %v703 = vadd.f32 %v480, %v702
        %704 = vmatmul.bf16.gmra.mxu0 %v560
        %v705 = vpop.f32.mrf.mxu0
        %v706 = vadd.f32 %v480, %v705
        %v707 = vpop.f32.mrf.mxu0
        %v708 = vadd.f32 %v480, %v707
        %709 = vmatmul.bf16.gmra.mxu0 %v561
        %v710 = vpop.f32.mrf.mxu0
        %v711 = vadd.f32 %v480, %v710
        %v712 = vpop.f32.mrf.mxu0
        %v713 = vadd.f32 %v480, %v712
        %714 = vdwg.mxu0
        %v715 = vmax.f32 %v636, 0.0
        %v716 = vmax.f32 %v638, 0.0
        %v717 = vmax.f32 %v641, 0.0
        %v718 = vmax.f32 %v643, 0.0
        %v719 = vmax.f32 %v646, 0.0
        %v720 = vmax.f32 %v648, 0.0
        %v721 = vmax.f32 %v651, 0.0
        %v722 = vmax.f32 %v653, 0.0
        %v723 = vmax.f32 %v656, 0.0
        %v724 = vmax.f32 %v658, 0.0
        %v725 = vmax.f32 %v661, 0.0
        %v726 = vmax.f32 %v663, 0.0
        %v727 = vmax.f32 %v666, 0.0
        %v728 = vmax.f32 %v668, 0.0
        %v729 = vmax.f32 %v671, 0.0
        %v730 = vmax.f32 %v673, 0.0
        %v731 = vmax.f32 %v676, 0.0
        %v732 = vmax.f32 %v678, 0.0
        %v733 = vmax.f32 %v681, 0.0
        %v734 = vmax.f32 %v683, 0.0
        %v735 = vmax.f32 %v686, 0.0
        %v736 = vmax.f32 %v688, 0.0
        %v737 = vmax.f32 %v691, 0.0
        %v738 = vmax.f32 %v693, 0.0
        %v739 = vmax.f32 %v696, 0.0
        %v740 = vmax.f32 %v698, 0.0
        %v741 = vmax.f32 %v701, 0.0
        %v742 = vmax.f32 %v703, 0.0
        %v743 = vmax.f32 %v706, 0.0
        %v744 = vmax.f32 %v708, 0.0
        %v745 = vmax.f32 %v711, 0.0
        %v746 = vmax.f32 %v713, 0.0
        %v747 = vpack.c.bf16 %v715, %v715
        %v748 = vpack.c.bf16 %v716, %v716
        %v749 = vpack.c.bf16 %v717, %v717
        %v750 = vpack.c.bf16 %v718, %v718
        %v751 = vpack.c.bf16 %v719, %v719
        %v752 = vpack.c.bf16 %v720, %v720
        %v753 = vpack.c.bf16 %v721, %v721
        %v754 = vpack.c.bf16 %v722, %v722
        %v755 = vpack.c.bf16 %v723, %v723
        %v756 = vpack.c.bf16 %v724, %v724
        %v757 = vpack.c.bf16 %v725, %v725
        %v758 = vpack.c.bf16 %v726, %v726
        %v759 = vpack.c.bf16 %v727, %v727
        %v760 = vpack.c.bf16 %v728, %v728
        %v761 = vpack.c.bf16 %v729, %v729
        %v762 = vpack.c.bf16 %v730, %v730
        %v763 = vpack.c.bf16 %v731, %v731
        %v764 = vpack.c.bf16 %v732, %v732
        %v765 = vpack.c.bf16 %v733, %v733
        %v766 = vpack.c.bf16 %v734, %v734
        %v767 = vpack.c.bf16 %v735, %v735
        %v768 = vpack.c.bf16 %v736, %v736
        %v769 = vpack.c.bf16 %v737, %v737
        %v770 = vpack.c.bf16 %v738, %v738
        %v771 = vpack.c.bf16 %v739, %v739
        %v772 = vpack.c.bf16 %v740, %v740
        %v773 = vpack.c.bf16 %v741, %v741
        %v774 = vpack.c.bf16 %v742, %v742
        %v775 = vpack.c.bf16 %v743, %v743
        %v776 = vpack.c.bf16 %v744, %v744
        %v777 = vpack.c.bf16 %v745, %v745
        %v778 = vpack.c.bf16 %v746, %v746
        %s779 = scalar_lea.vmem [#allocation2], 24
        %780 = vst.msk [vmem:[%s779] sm:$0xf] %vm300, %v747
        %781 = vst.msk [vmem:[%s779 + $0x4] sm:$0xf] %vm300, %v748
        %782 = vst.msk [vmem:[%s779 + $0xc] sm:$0xf] %vm300, %v749
        %783 = vst.msk [vmem:[%s779 + $0x10] sm:$0xf] %vm300, %v750
        %784 = vst.msk [vmem:[%s779 + $0x18] sm:$0xf] %vm300, %v751
        %785 = vst.msk [vmem:[%s779 + $0x1c] sm:$0xf] %vm300, %v752
        %786 = vst.msk [vmem:[%s779 + $0x24] sm:$0xf] %vm300, %v753
        %787 = vst.msk [vmem:[%s779 + $0x28] sm:$0xf] %vm300, %v754
        %788 = vst.msk [vmem:[%s779 + $0x30] sm:$0xf] %vm300, %v755
        %789 = vst.msk [vmem:[%s779 + $0x34] sm:$0xf] %vm300, %v756
        %790 = vst.msk [vmem:[%s779 + $0x3c] sm:$0xf] %vm300, %v757
        %791 = vst.msk [vmem:[%s779 + $0x40] sm:$0xf] %vm300, %v758
        %792 = vst.msk [vmem:[%s779 + $0x48] sm:$0xf] %vm300, %v759
        %793 = vst.msk [vmem:[%s779 + $0x4c] sm:$0xf] %vm300, %v760
        %794 = vst.msk [vmem:[%s779 + $0x54] sm:$0xf] %vm300, %v761
        %795 = vst.msk [vmem:[%s779 + $0x58] sm:$0xf] %vm300, %v762
        %796 = vst.msk [vmem:[%s779 + $0x60] sm:$0xf] %vm300, %v763
        %797 = vst.msk [vmem:[%s779 + $0x64] sm:$0xf] %vm300, %v764
        %798 = vst.msk [vmem:[%s779 + $0x6c] sm:$0xf] %vm300, %v765
        %799 = vst.msk [vmem:[%s779 + $0x70] sm:$0xf] %vm300, %v766
        %800 = vst.msk [vmem:[%s779 + $0x78] sm:$0xf] %vm300, %v767
        %801 = vst.msk [vmem:[%s779 + $0x7c] sm:$0xf] %vm300, %v768
        %802 = vst.msk [vmem:[%s779 + $0x84] sm:$0xf] %vm300, %v769
        %803 = vst.msk [vmem:[%s779 + $0x88] sm:$0xf] %vm300, %v770
        %804 = vst.msk [vmem:[%s779 + $0x90] sm:$0xf] %vm300, %v771
        %805 = vst.msk [vmem:[%s779 + $0x94] sm:$0xf] %vm300, %v772
        %806 = vst.msk [vmem:[%s779 + $0x9c] sm:$0xf] %vm300, %v773
        %807 = vst.msk [vmem:[%s779 + $0xa0] sm:$0xf] %vm300, %v774
        %808 = vst.msk [vmem:[%s779 + $0xa8] sm:$0xf] %vm300, %v775
        %809 = vst.msk [vmem:[%s779 + $0xac] sm:$0xf] %vm300, %v776
        %810 = vst.msk [vmem:[%s779 + $0xb4] sm:$0xf] %vm300, %v777
        %811 = vst.msk [vmem:[%s779 + $0xb8] sm:$0xf] %vm300, %v778
        %v812 = vld [vmem:[#allocation2 + $0x8] sm:$0xf]
        %v813 = vld [vmem:[#allocation2 + $0xc] sm:$0xf]
        %v814 = vld [vmem:[#allocation2 + $0x10] sm:$0xf]
        %v815 = vld [vmem:[#allocation2 + $0x14] sm:$0xf]
        %v816 = vld [vmem:[#allocation2 + $0x18] sm:$0xf]
        %v817 = vld [vmem:[#allocation2 + $0x1c] sm:$0xf]
        %v818 = vld [vmem:[#allocation2 + $0x20] sm:$0xf]
        %v819 = vld [vmem:[#allocation2 + $0x24] sm:$0xf]
        %v820 = vld [vmem:[#allocation2 + $0x28] sm:$0xf]
        %v821 = vld [vmem:[#allocation2 + $0x2c] sm:$0xf]
        %v822 = vld [vmem:[#allocation2 + $0x30] sm:$0xf]
        %v823 = vld [vmem:[#allocation2 + $0x34] sm:$0xf]
        %v824 = vld [vmem:[#allocation2 + $0x38] sm:$0xf]
        %v825 = vld [vmem:[#allocation2 + $0x3c] sm:$0xf]
        %v826 = vld [vmem:[#allocation2 + $0x40] sm:$0xf]
        %v827 = vld [vmem:[#allocation2 + $0x44] sm:$0xf]
        %v828 = vld [vmem:[#allocation2 + $0x48] sm:$0xf]
        %v829 = vld [vmem:[#allocation2 + $0x4c] sm:$0xf]
        %v830 = vld [vmem:[#allocation2 + $0x50] sm:$0xf]
        %v831 = vld [vmem:[#allocation2 + $0x54] sm:$0xf]
        %v832 = vld [vmem:[#allocation2 + $0x58] sm:$0xf]
        %v833 = vld [vmem:[#allocation2 + $0x5c] sm:$0xf]
        %v834 = vld [vmem:[#allocation2 + $0x60] sm:$0xf]
        %v835 = vld [vmem:[#allocation2 + $0x64] sm:$0xf]
        %v836 = vld [vmem:[#allocation2 + $0x68] sm:$0xf]
        %v837 = vld [vmem:[#allocation2 + $0x6c] sm:$0xf]
        %v838 = vld [vmem:[#allocation2 + $0x70] sm:$0xf]
        %v839 = vld [vmem:[#allocation2 + $0x74] sm:$0xf]
        %v840 = vld [vmem:[#allocation2 + $0x78] sm:$0xf]
        %v841 = vld [vmem:[#allocation2 + $0x7c] sm:$0xf]
        %v842 = vld [vmem:[#allocation2 + $0x80] sm:$0xf]
        %v843 = vld [vmem:[#allocation2 + $0x84] sm:$0xf]
        %v844 = vld [vmem:[#allocation2 + $0x88] sm:$0xf]
        %v845 = vld [vmem:[#allocation2 + $0x8c] sm:$0xf]
        %v846 = vld [vmem:[#allocation2 + $0x90] sm:$0xf]
        %v847 = vld [vmem:[#allocation2 + $0x94] sm:$0xf]
        %v848 = vld [vmem:[#allocation2 + $0x98] sm:$0xf]
        %v849 = vld [vmem:[#allocation2 + $0x9c] sm:$0xf]
        %v850 = vld [vmem:[#allocation2 + $0xa0] sm:$0xf]
        %v851 = vld [vmem:[#allocation2 + $0xa4] sm:$0xf]
        %v852 = vld [vmem:[#allocation2 + $0xa8] sm:$0xf]
        %v853 = vld [vmem:[#allocation2 + $0xac] sm:$0xf]
        %v854 = vld [vmem:[#allocation2 + $0xb0] sm:$0xf]
        %v855 = vld [vmem:[#allocation2 + $0xb4] sm:$0xf]
        %v856 = vld [vmem:[#allocation2 + $0xb8] sm:$0xf]
        %v857 = vld [vmem:[#allocation2 + $0xbc] sm:$0xf]
        %v858 = vld [vmem:[#allocation2 + $0xc0] sm:$0xf]
        %v859 = vld [vmem:[#allocation2 + $0xc4] sm:$0xf]
        %v860 = vld [vmem:[#allocation2 + $0xc8] sm:$0xf]
        %v861 = vld [vmem:[#allocation2 + $0xcc] sm:$0xf]
        %v862 = vld [vmem:[#allocation2 + $0xd0] sm:$0xf]
        %v863 = vld [vmem:[#allocation2 + $0xd4] sm:$0xf]
        %v864 = vld [vmem:[#allocation2 + $0xd8] sm:$0xf]
        %v865 = vld [vmem:[#allocation2 + $0xdc] sm:$0xf]
        %v866 = vld [vmem:[#allocation2 + $0xe0] sm:$0xf]
        %v867 = vld [vmem:[#allocation2 + $0xe4] sm:$0xf]
        %v923 = vunpack.c.l.b16 %v812
        %v924 = vunpack.c.l.b16 %v813
        %v925 = vunpack.c.l.b16 %v814
        %v926 = vunpack.c.l.b16 %v815
        %v927 = vunpack.c.l.b16 %v816
        %v928 = vunpack.c.l.b16 %v817
        %v929 = vunpack.c.l.b16 %v818
        %v930 = vunpack.c.l.b16 %v819
        %v931 = vunpack.c.l.b16 %v820
        %v932 = vunpack.c.l.b16 %v821
        %v933 = vunpack.c.l.b16 %v822
        %v934 = vunpack.c.l.b16 %v823
        %v935 = vunpack.c.l.b16 %v824
        %v936 = vunpack.c.l.b16 %v825
        %v937 = vunpack.c.l.b16 %v826
        %v938 = vunpack.c.l.b16 %v827
        %v939 = vunpack.c.l.b16 %v828
        %v940 = vunpack.c.l.b16 %v829
        %v941 = vunpack.c.l.b16 %v830
        %v942 = vunpack.c.l.b16 %v831
        %v943 = vunpack.c.l.b16 %v832
        %v944 = vunpack.c.l.b16 %v833
        %v945 = vunpack.c.l.b16 %v834
        %v946 = vunpack.c.l.b16 %v835
        %v947 = vunpack.c.l.b16 %v836
        %v948 = vunpack.c.l.b16 %v837
        %v949 = vunpack.c.l.b16 %v838
        %v950 = vunpack.c.l.b16 %v839
        %v951 = vunpack.c.l.b16 %v840
        %v952 = vunpack.c.l.b16 %v841
        %v953 = vunpack.c.l.b16 %v842
        %v954 = vunpack.c.l.b16 %v843
        %v955 = vunpack.c.l.b16 %v844
        %v956 = vunpack.c.l.b16 %v845
        %v957 = vunpack.c.l.b16 %v846
        %v958 = vunpack.c.l.b16 %v847
        %v959 = vunpack.c.l.b16 %v848
        %v960 = vunpack.c.l.b16 %v849
        %v961 = vunpack.c.l.b16 %v850
        %v962 = vunpack.c.l.b16 %v851
        %v963 = vunpack.c.l.b16 %v852
        %v964 = vunpack.c.l.b16 %v853
        %v965 = vunpack.c.l.b16 %v854
        %v966 = vunpack.c.l.b16 %v855
        %v967 = vunpack.c.l.b16 %v856
        %v968 = vunpack.c.l.b16 %v857
        %v969 = vunpack.c.l.b16 %v858
        %v970 = vunpack.c.l.b16 %v859
        %v971 = vunpack.c.l.b16 %v860
        %v972 = vunpack.c.l.b16 %v861
        %v973 = vunpack.c.l.b16 %v862
        %v974 = vunpack.c.l.b16 %v863
        %v975 = vunpack.c.l.b16 %v864
        %v976 = vunpack.c.l.b16 %v865
        %v977 = vunpack.c.l.b16 %v866
        %v978 = vpack.c.b16 %v924, %v923
        %v979 = vpack.c.b16 %v926, %v925
        %v980 = vpack.c.b16 %v928, %v927
        %v981 = vpack.c.b16 %v930, %v929
        %v982 = vpack.c.b16 %v932, %v931
        %v983 = vpack.c.b16 %v934, %v933
        %v984 = vpack.c.b16 %v936, %v935
        %v985 = vpack.c.b16 %v938, %v937
        %v986 = vpack.c.b16 %v940, %v939
        %v987 = vpack.c.b16 %v942, %v941
        %v988 = vpack.c.b16 %v944, %v943
        %v989 = vpack.c.b16 %v946, %v945
        %v990 = vpack.c.b16 %v948, %v947
        %v991 = vpack.c.b16 %v950, %v949
        %v992 = vpack.c.b16 %v952, %v951
        %v993 = vpack.c.b16 %v954, %v953
        %v994 = vpack.c.b16 %v956, %v955
        %v995 = vpack.c.b16 %v958, %v957
        %v996 = vpack.c.b16 %v960, %v959
        %v997 = vpack.c.b16 %v962, %v961
        %v998 = vpack.c.b16 %v964, %v963
        %v999 = vpack.c.b16 %v966, %v965
        %v1000 = vpack.c.b16 %v968, %v967
        %v1001 = vpack.c.b16 %v970, %v969
        %v1002 = vpack.c.b16 %v972, %v971
        %v1003 = vpack.c.b16 %v974, %v973
        %v1004 = vpack.c.b16 %v976, %v975
        %v1005 = vpack.c.b16 %v977, %v977
        %v1006 = vpack.c.b16 %v925, %v924
        %v1007 = vpack.c.b16 %v927, %v926
        %v1008 = vpack.c.b16 %v929, %v928
        %v1009 = vpack.c.b16 %v931, %v930
        %v1010 = vpack.c.b16 %v933, %v932
        %v1011 = vpack.c.b16 %v935, %v934
        %v1012 = vpack.c.b16 %v937, %v936
        %v1013 = vpack.c.b16 %v939, %v938
        %v1014 = vpack.c.b16 %v941, %v940
        %v1015 = vpack.c.b16 %v943, %v942
        %v1016 = vpack.c.b16 %v945, %v944
        %v1017 = vpack.c.b16 %v947, %v946
        %v1018 = vpack.c.b16 %v949, %v948
        %v1019 = vpack.c.b16 %v951, %v950
        %v1020 = vpack.c.b16 %v953, %v952
        %v1021 = vpack.c.b16 %v955, %v954
        %v1022 = vpack.c.b16 %v957, %v956
        %v1023 = vpack.c.b16 %v959, %v958
        %v1024 = vpack.c.b16 %v961, %v960
        %v1025 = vpack.c.b16 %v963, %v962
        %v1026 = vpack.c.b16 %v965, %v964
        %v1027 = vpack.c.b16 %v967, %v966
        %v1028 = vpack.c.b16 %v969, %v968
        %v1029 = vpack.c.b16 %v971, %v970
        %v1030 = vpack.c.b16 %v973, %v972
        %v1031 = vpack.c.b16 %v975, %v974
        %v1032 = vpack.c.b16 %v977, %v976
        %vm1033 = vsmask.f32 3328
        %v1035 = vshrl.u32 %v1006, 16
        %v1037 = vrot.slane %v1035, 4
        %v1038 = vshll.u32 %v1006, 16
        %v1040 = vrot.slane %v1038, 5
        %v1041 = vor.u32 %v1037, %v1040
        %v1043 = vshrl.u32 %v1007, 16
        %v1045 = vrot.slane %v1043, 4
        %v1046 = vshll.u32 %v1007, 16
        %v1048 = vrot.slane %v1046, 5
        %v1049 = vor.u32 %v1045, %v1048
        %v1050 = vsel %vm1033, %v1041, %v1049
        %v1052 = vshrl.u32 %v1008, 16
        %v1054 = vrot.slane %v1052, 4
        %v1055 = vshll.u32 %v1008, 16
        %v1057 = vrot.slane %v1055, 5
        %v1058 = vor.u32 %v1054, %v1057
        %v1059 = vsel %vm1033, %v1049, %v1058
        %v1061 = vshrl.u32 %v1009, 16
        %v1063 = vrot.slane %v1061, 4
        %v1064 = vshll.u32 %v1009, 16
        %v1066 = vrot.slane %v1064, 5
        %v1067 = vor.u32 %v1063, %v1066
        %v1068 = vsel %vm1033, %v1058, %v1067
        %v1070 = vshrl.u32 %v1010, 16
        %v1072 = vrot.slane %v1070, 4
        %v1073 = vshll.u32 %v1010, 16
        %v1075 = vrot.slane %v1073, 5
        %v1076 = vor.u32 %v1072, %v1075
        %v1077 = vsel %vm1033, %v1067, %v1076
        %v1079 = vshrl.u32 %v1011, 16
        %v1081 = vrot.slane %v1079, 4
        %v1082 = vshll.u32 %v1011, 16
        %v1084 = vrot.slane %v1082, 5
        %v1085 = vor.u32 %v1081, %v1084
        %v1086 = vsel %vm1033, %v1076, %v1085
        %v1088 = vshrl.u32 %v1012, 16
        %v1090 = vrot.slane %v1088, 4
        %v1091 = vshll.u32 %v1012, 16
        %v1093 = vrot.slane %v1091, 5
        %v1094 = vor.u32 %v1090, %v1093
        %v1095 = vsel %vm1033, %v1085, %v1094
        %v1097 = vshrl.u32 %v1013, 16
        %v1099 = vrot.slane %v1097, 4
        %v1100 = vshll.u32 %v1013, 16
        %v1102 = vrot.slane %v1100, 5
        %v1103 = vor.u32 %v1099, %v1102
        %v1104 = vsel %vm1033, %v1094, %v1103
        %v1106 = vshrl.u32 %v1014, 16
        %v1108 = vrot.slane %v1106, 4
        %v1109 = vshll.u32 %v1014, 16
        %v1111 = vrot.slane %v1109, 5
        %v1112 = vor.u32 %v1108, %v1111
        %v1113 = vsel %vm1033, %v1103, %v1112
        %v1115 = vshrl.u32 %v1015, 16
        %v1117 = vrot.slane %v1115, 4
        %v1118 = vshll.u32 %v1015, 16
        %v1120 = vrot.slane %v1118, 5
        %v1121 = vor.u32 %v1117, %v1120
        %v1122 = vsel %vm1033, %v1112, %v1121
        %v1124 = vshrl.u32 %v1016, 16
        %v1126 = vrot.slane %v1124, 4
        %v1127 = vshll.u32 %v1016, 16
        %v1129 = vrot.slane %v1127, 5
        %v1130 = vor.u32 %v1126, %v1129
        %v1131 = vsel %vm1033, %v1121, %v1130
        %v1133 = vshrl.u32 %v1017, 16
        %v1135 = vrot.slane %v1133, 4
        %v1136 = vshll.u32 %v1017, 16
        %v1138 = vrot.slane %v1136, 5
        %v1139 = vor.u32 %v1135, %v1138
        %v1140 = vsel %vm1033, %v1130, %v1139
        %v1142 = vshrl.u32 %v1018, 16
        %v1144 = vrot.slane %v1142, 4
        %v1145 = vshll.u32 %v1018, 16
        %v1147 = vrot.slane %v1145, 5
        %v1148 = vor.u32 %v1144, %v1147
        %v1149 = vsel %vm1033, %v1139, %v1148
        %v1151 = vshrl.u32 %v1019, 16
        %v1153 = vrot.slane %v1151, 4
        %v1154 = vshll.u32 %v1019, 16
        %v1156 = vrot.slane %v1154, 5
        %v1157 = vor.u32 %v1153, %v1156
        %v1158 = vsel %vm1033, %v1148, %v1157
        %v1160 = vshrl.u32 %v1020, 16
        %v1162 = vrot.slane %v1160, 4
        %v1163 = vshll.u32 %v1020, 16
        %v1165 = vrot.slane %v1163, 5
        %v1166 = vor.u32 %v1162, %v1165
        %v1167 = vsel %vm1033, %v1157, %v1166
        %v1169 = vshrl.u32 %v1021, 16
        %v1171 = vrot.slane %v1169, 4
        %v1172 = vshll.u32 %v1021, 16
        %v1174 = vrot.slane %v1172, 5
        %v1175 = vor.u32 %v1171, %v1174
        %v1176 = vsel %vm1033, %v1166, %v1175
        %v1178 = vshrl.u32 %v1022, 16
        %v1180 = vrot.slane %v1178, 4
        %v1181 = vshll.u32 %v1022, 16
        %v1183 = vrot.slane %v1181, 5
        %v1184 = vor.u32 %v1180, %v1183
        %v1185 = vsel %vm1033, %v1175, %v1184
        %v1187 = vshrl.u32 %v1023, 16
        %v1189 = vrot.slane %v1187, 4
        %v1190 = vshll.u32 %v1023, 16
        %v1192 = vrot.slane %v1190, 5
        %v1193 = vor.u32 %v1189, %v1192
        %v1194 = vsel %vm1033, %v1184, %v1193
        %v1196 = vshrl.u32 %v1024, 16
        %v1198 = vrot.slane %v1196, 4
        %v1199 = vshll.u32 %v1024, 16
        %v1201 = vrot.slane %v1199, 5
        %v1202 = vor.u32 %v1198, %v1201
        %v1203 = vsel %vm1033, %v1193, %v1202
        %v1205 = vshrl.u32 %v1025, 16
        %v1207 = vrot.slane %v1205, 4
        %v1208 = vshll.u32 %v1025, 16
        %v1210 = vrot.slane %v1208, 5
        %v1211 = vor.u32 %v1207, %v1210
        %v1212 = vsel %vm1033, %v1202, %v1211
        %v1214 = vshrl.u32 %v1026, 16
        %v1216 = vrot.slane %v1214, 4
        %v1217 = vshll.u32 %v1026, 16
        %v1219 = vrot.slane %v1217, 5
        %v1220 = vor.u32 %v1216, %v1219
        %v1221 = vsel %vm1033, %v1211, %v1220
        %v1223 = vshrl.u32 %v1027, 16
        %v1225 = vrot.slane %v1223, 4
        %v1226 = vshll.u32 %v1027, 16
        %v1228 = vrot.slane %v1226, 5
        %v1229 = vor.u32 %v1225, %v1228
        %v1230 = vsel %vm1033, %v1220, %v1229
        %v1232 = vshrl.u32 %v1028, 16
        %v1234 = vrot.slane %v1232, 4
        %v1235 = vshll.u32 %v1028, 16
        %v1237 = vrot.slane %v1235, 5
        %v1238 = vor.u32 %v1234, %v1237
        %v1239 = vsel %vm1033, %v1229, %v1238
        %v1241 = vshrl.u32 %v1029, 16
        %v1243 = vrot.slane %v1241, 4
        %v1244 = vshll.u32 %v1029, 16
        %v1246 = vrot.slane %v1244, 5
        %v1247 = vor.u32 %v1243, %v1246
        %v1248 = vsel %vm1033, %v1238, %v1247
        %v1250 = vshrl.u32 %v1030, 16
        %v1252 = vrot.slane %v1250, 4
        %v1253 = vshll.u32 %v1030, 16
        %v1255 = vrot.slane %v1253, 5
        %v1256 = vor.u32 %v1252, %v1255
        %v1257 = vsel %vm1033, %v1247, %v1256
        %v1259 = vshrl.u32 %v1031, 16
        %v1261 = vrot.slane %v1259, 4
        %v1262 = vshll.u32 %v1031, 16
        %v1264 = vrot.slane %v1262, 5
        %v1265 = vor.u32 %v1261, %v1264
        %v1266 = vsel %vm1033, %v1256, %v1265
        %v1268 = vshrl.u32 %v1032, 16
        %v1270 = vrot.slane %v1268, 4
        %v1271 = vshll.u32 %v1032, 16
        %v1273 = vrot.slane %v1271, 5
        %v1274 = vor.u32 %v1270, %v1273
        %v1275 = vsel %vm1033, %v1265, %v1274
        %1276 = vrot.lane.b32.xlu0 %v1041, 32
        %v1277 = vpop.permute.xlu0 %1276
        %1278 = vrot.lane.b32.xlu0 %v1050, 32
        %v1279 = vpop.permute.xlu0 %1278
        %1280 = vrot.lane.b32.xlu0 %v1059, 32
        %v1281 = vpop.permute.xlu0 %1280
        %1282 = vrot.lane.b32.xlu0 %v1068, 32
        %v1283 = vpop.permute.xlu0 %1282
        %1284 = vrot.lane.b32.xlu0 %v1077, 32
        %v1285 = vpop.permute.xlu0 %1284
        %1286 = vrot.lane.b32.xlu0 %v1086, 32
        %v1287 = vpop.permute.xlu0 %1286
        %1288 = vrot.lane.b32.xlu0 %v1095, 32
        %v1289 = vpop.permute.xlu0 %1288
        %1290 = vrot.lane.b32.xlu0 %v1104, 32
        %v1291 = vpop.permute.xlu0 %1290
        %1292 = vrot.lane.b32.xlu0 %v1113, 32
        %v1293 = vpop.permute.xlu0 %1292
        %1294 = vrot.lane.b32.xlu0 %v1122, 32
        %v1295 = vpop.permute.xlu0 %1294
        %1296 = vrot.lane.b32.xlu0 %v1131, 32
        %v1297 = vpop.permute.xlu0 %1296
        %1298 = vrot.lane.b32.xlu0 %v1140, 32
        %v1299 = vpop.permute.xlu0 %1298
        %1300 = vrot.lane.b32.xlu0 %v1149, 32
        %v1301 = vpop.permute.xlu0 %1300
        %1302 = vrot.lane.b32.xlu0 %v1158, 32
        %v1303 = vpop.permute.xlu0 %1302
        %1304 = vrot.lane.b32.xlu0 %v1167, 32
        %v1305 = vpop.permute.xlu0 %1304
        %1306 = vrot.lane.b32.xlu0 %v1176, 32
        %v1307 = vpop.permute.xlu0 %1306
        %1308 = vrot.lane.b32.xlu0 %v1185, 32
        %v1309 = vpop.permute.xlu0 %1308
        %1310 = vrot.lane.b32.xlu0 %v1194, 32
        %v1311 = vpop.permute.xlu0 %1310
        %1312 = vrot.lane.b32.xlu0 %v1203, 32
        %v1313 = vpop.permute.xlu0 %1312
        %1314 = vrot.lane.b32.xlu0 %v1212, 32
        %v1315 = vpop.permute.xlu0 %1314
        %1316 = vrot.lane.b32.xlu0 %v1221, 32
        %v1317 = vpop.permute.xlu0 %1316
        %1318 = vrot.lane.b32.xlu0 %v1230, 32
        %v1319 = vpop.permute.xlu0 %1318
        %1320 = vrot.lane.b32.xlu0 %v1239, 32
        %v1321 = vpop.permute.xlu0 %1320
        %1322 = vrot.lane.b32.xlu0 %v1248, 32
        %v1323 = vpop.permute.xlu0 %1322
        %1324 = vrot.lane.b32.xlu0 %v1257, 32
        %v1325 = vpop.permute.xlu0 %1324
        %1326 = vrot.lane.b32.xlu0 %v1266, 32
        %v1327 = vpop.permute.xlu0 %1326
        %1328 = vrot.lane.b32.xlu0 %v1275, 32
        %v1329 = vpop.permute.xlu0 %1328
        %1330 = vrot.lane.b32.xlu0 %v1274, 32
        %v1331 = vpop.permute.xlu0 %1330
        %v1333 = vunpack.c.l.b16 %v867
        %v1334 = vpack.c.b16 %v1333, %v1333
        %vm1335 = vcmask 1042432
        %v1336 = vrot.slane %v1006, 5
        %v1337 = vrot.slane %v1007, 5
        %v1338 = vsel %vm1335, %v1336, %v1337
        %v1339 = vrot.slane %v1008, 5
        %v1340 = vsel %vm1335, %v1337, %v1339
        %v1341 = vrot.slane %v1009, 5
        %v1342 = vsel %vm1335, %v1339, %v1341
        %v1343 = vrot.slane %v1010, 5
        %v1344 = vsel %vm1335, %v1341, %v1343
        %v1345 = vrot.slane %v1011, 5
        %v1346 = vsel %vm1335, %v1343, %v1345
        %v1347 = vrot.slane %v1012, 5
        %v1348 = vsel %vm1335, %v1345, %v1347
        %v1349 = vrot.slane %v1013, 5
        %v1350 = vsel %vm1335, %v1347, %v1349
        %v1351 = vrot.slane %v1014, 5
        %v1352 = vsel %vm1335, %v1349, %v1351
        %v1353 = vrot.slane %v1015, 5
        %v1354 = vsel %vm1335, %v1351, %v1353
        %v1355 = vrot.slane %v1016, 5
        %v1356 = vsel %vm1335, %v1353, %v1355
        %v1357 = vrot.slane %v1017, 5
        %v1358 = vsel %vm1335, %v1355, %v1357
        %v1359 = vrot.slane %v1018, 5
        %v1360 = vsel %vm1335, %v1357, %v1359
        %v1361 = vrot.slane %v1019, 5
        %v1362 = vsel %vm1335, %v1359, %v1361
        %v1363 = vrot.slane %v1020, 5
        %v1364 = vsel %vm1335, %v1361, %v1363
        %v1365 = vrot.slane %v1021, 5
        %v1366 = vsel %vm1335, %v1363, %v1365
        %v1367 = vrot.slane %v1022, 5
        %v1368 = vsel %vm1335, %v1365, %v1367
        %v1369 = vrot.slane %v1023, 5
        %v1370 = vsel %vm1335, %v1367, %v1369
        %v1371 = vrot.slane %v1024, 5
        %v1372 = vsel %vm1335, %v1369, %v1371
        %v1373 = vrot.slane %v1025, 5
        %v1374 = vsel %vm1335, %v1371, %v1373
        %v1375 = vrot.slane %v1026, 5
        %v1376 = vsel %vm1335, %v1373, %v1375
        %v1377 = vrot.slane %v1027, 5
        %v1378 = vsel %vm1335, %v1375, %v1377
        %v1379 = vrot.slane %v1028, 5
        %v1380 = vsel %vm1335, %v1377, %v1379
        %v1381 = vrot.slane %v1029, 5
        %v1382 = vsel %vm1335, %v1379, %v1381
        %v1383 = vrot.slane %v1030, 5
        %v1384 = vsel %vm1335, %v1381, %v1383
        %v1385 = vrot.slane %v1031, 5
        %v1386 = vsel %vm1335, %v1383, %v1385
        %v1387 = vrot.slane %v1032, 5
        %v1388 = vsel %vm1335, %v1385, %v1387
        %v1389 = vrot.slane %v1334, 5
        %v1390 = vsel %vm1335, %v1387, %v1389
        %1391 = vrot.lane.b32.xlu0 %v1336, 64
        %v1392 = vpop.permute.xlu0 %1391
        %1393 = vrot.lane.b32.xlu0 %v1338, 64
        %v1394 = vpop.permute.xlu0 %1393
        %1395 = vrot.lane.b32.xlu0 %v1340, 64
        %v1396 = vpop.permute.xlu0 %1395
        %1397 = vrot.lane.b32.xlu0 %v1342, 64
        %v1398 = vpop.permute.xlu0 %1397
        %1399 = vrot.lane.b32.xlu0 %v1344, 64
        %v1400 = vpop.permute.xlu0 %1399
        %1401 = vrot.lane.b32.xlu0 %v1346, 64
        %v1402 = vpop.permute.xlu0 %1401
        %1403 = vrot.lane.b32.xlu0 %v1348, 64
        %v1404 = vpop.permute.xlu0 %1403
        %1405 = vrot.lane.b32.xlu0 %v1350, 64
        %v1406 = vpop.permute.xlu0 %1405
        %1407 = vrot.lane.b32.xlu0 %v1352, 64
        %v1408 = vpop.permute.xlu0 %1407
        %1409 = vrot.lane.b32.xlu0 %v1354, 64
        %v1410 = vpop.permute.xlu0 %1409
        %1411 = vrot.lane.b32.xlu0 %v1356, 64
        %v1412 = vpop.permute.xlu0 %1411
        %1413 = vrot.lane.b32.xlu0 %v1358, 64
        %v1414 = vpop.permute.xlu0 %1413
        %1415 = vrot.lane.b32.xlu0 %v1360, 64
        %v1416 = vpop.permute.xlu0 %1415
        %1417 = vrot.lane.b32.xlu0 %v1362, 64
        %v1418 = vpop.permute.xlu0 %1417
        %1419 = vrot.lane.b32.xlu0 %v1364, 64
        %v1420 = vpop.permute.xlu0 %1419
        %1421 = vrot.lane.b32.xlu0 %v1366, 64
        %v1422 = vpop.permute.xlu0 %1421
        %1423 = vrot.lane.b32.xlu0 %v1368, 64
        %v1424 = vpop.permute.xlu0 %1423
        %1425 = vrot.lane.b32.xlu0 %v1370, 64
        %v1426 = vpop.permute.xlu0 %1425
        %1427 = vrot.lane.b32.xlu0 %v1372, 64
        %v1428 = vpop.permute.xlu0 %1427
        %1429 = vrot.lane.b32.xlu0 %v1374, 64
        %v1430 = vpop.permute.xlu0 %1429
        %1431 = vrot.lane.b32.xlu0 %v1376, 64
        %v1432 = vpop.permute.xlu0 %1431
        %1433 = vrot.lane.b32.xlu0 %v1378, 64
        %v1434 = vpop.permute.xlu0 %1433
        %1435 = vrot.lane.b32.xlu0 %v1380, 64
        %v1436 = vpop.permute.xlu0 %1435
        %1437 = vrot.lane.b32.xlu0 %v1382, 64
        %v1438 = vpop.permute.xlu0 %1437
        %1439 = vrot.lane.b32.xlu0 %v1384, 64
        %v1440 = vpop.permute.xlu0 %1439
        %1441 = vrot.lane.b32.xlu0 %v1386, 64
        %v1442 = vpop.permute.xlu0 %1441
        %1443 = vrot.lane.b32.xlu0 %v1388, 64
        %v1444 = vpop.permute.xlu0 %1443
        %1445 = vrot.lane.b32.xlu0 %v1390, 64
        %v1446 = vpop.permute.xlu0 %1445
        %vm1447 = vcmask 261120
        %v1450 = vsel %vm1447, %v978, %v1277
        %v1453 = vsel %vm1447, %v979, %v1279
        %v1456 = vsel %vm1447, %v980, %v1281
        %v1459 = vsel %vm1447, %v981, %v1283
        %v1462 = vsel %vm1447, %v982, %v1285
        %v1465 = vsel %vm1447, %v983, %v1287
        %v1468 = vsel %vm1447, %v984, %v1289
        %v1471 = vsel %vm1447, %v985, %v1291
        %v1474 = vsel %vm1447, %v986, %v1293
        %v1477 = vsel %vm1447, %v987, %v1295
        %v1480 = vsel %vm1447, %v988, %v1297
        %v1483 = vsel %vm1447, %v989, %v1299
        %v1486 = vsel %vm1447, %v990, %v1301
        %v1489 = vsel %vm1447, %v991, %v1303
        %v1492 = vsel %vm1447, %v992, %v1305
        %v1495 = vsel %vm1447, %v993, %v1307
        %v1498 = vsel %vm1447, %v994, %v1309
        %v1501 = vsel %vm1447, %v995, %v1311
        %v1504 = vsel %vm1447, %v996, %v1313
        %v1507 = vsel %vm1447, %v997, %v1315
        %v1510 = vsel %vm1447, %v998, %v1317
        %v1513 = vsel %vm1447, %v999, %v1319
        %v1516 = vsel %vm1447, %v1000, %v1321
        %v1519 = vsel %vm1447, %v1001, %v1323
        %v1522 = vsel %vm1447, %v1002, %v1325
        %v1525 = vsel %vm1447, %v1003, %v1327
        %v1528 = vsel %vm1447, %v1004, %v1329
        %v1531 = vsel %vm1447, %v1005, %v1331
        %vm1532 = vcmask 523264
        %v1534 = vsel %vm1532, %v1450, %v1392
        %v1536 = vsel %vm1532, %v1453, %v1394
        %v1538 = vsel %vm1532, %v1456, %v1396
        %v1540 = vsel %vm1532, %v1459, %v1398
        %v1542 = vsel %vm1532, %v1462, %v1400
        %v1544 = vsel %vm1532, %v1465, %v1402
        %v1546 = vsel %vm1532, %v1468, %v1404
        %v1548 = vsel %vm1532, %v1471, %v1406
        %v1550 = vsel %vm1532, %v1474, %v1408
        %v1552 = vsel %vm1532, %v1477, %v1410
        %v1554 = vsel %vm1532, %v1480, %v1412
        %v1556 = vsel %vm1532, %v1483, %v1414
        %v1558 = vsel %vm1532, %v1486, %v1416
        %v1560 = vsel %vm1532, %v1489, %v1418
        %v1562 = vsel %vm1532, %v1492, %v1420
        %v1564 = vsel %vm1532, %v1495, %v1422
        %v1566 = vsel %vm1532, %v1498, %v1424
        %v1568 = vsel %vm1532, %v1501, %v1426
        %v1570 = vsel %vm1532, %v1504, %v1428
        %v1572 = vsel %vm1532, %v1507, %v1430
        %v1574 = vsel %vm1532, %v1510, %v1432
        %v1576 = vsel %vm1532, %v1513, %v1434
        %v1578 = vsel %vm1532, %v1516, %v1436
        %v1580 = vsel %vm1532, %v1519, %v1438
        %v1582 = vsel %vm1532, %v1522, %v1440
        %v1584 = vsel %vm1532, %v1525, %v1442
        %v1586 = vsel %vm1532, %v1528, %v1444
        %v1588 = vsel %vm1532, %v1531, %v1446
        %v1589 = vld [vmem:[%s3] sm:$0xf]
        %v1590 = vld [vmem:[%s3 + $0x4] sm:$0xf]
        %v1591 = vld [vmem:[%s3 + $0x8] sm:$0xf]
        %v1592 = vld [vmem:[%s3 + $0xc] sm:$0xf]
        %v1593 = vld [vmem:[%s3 + $0x10] sm:$0xf]
        %v1594 = vld [vmem:[%s3 + $0x14] sm:$0xf]
        %v1595 = vld [vmem:[%s3 + $0x18] sm:$0xf]
        %v1596 = vld [vmem:[%s3 + $0x1c] sm:$0xf]
        %v1597 = vld [vmem:[%s3 + $0x20] sm:$0xf]
        %v1598 = vld [vmem:[%s3 + $0x24] sm:$0xf]
        %v1599 = vld [vmem:[%s3 + $0x28] sm:$0xf]
        %v1600 = vld [vmem:[%s3 + $0x2c] sm:$0xf]
        %s1601 = scalar_lea.vmem %s3, 48
        %v1602 = vld [vmem:[%s1601] sm:$0xf]
        %v1603 = vld [vmem:[%s1601 + $0x4] sm:$0xf]
        %v1604 = vld [vmem:[%s1601 + $0x8] sm:$0xf]
        %v1605 = vld [vmem:[%s1601 + $0xc] sm:$0xf]
        %v1606 = vld [vmem:[%s1601 + $0x10] sm:$0xf]
        %v1607 = vld [vmem:[%s1601 + $0x14] sm:$0xf]
        %v1608 = vld [vmem:[%s1601 + $0x18] sm:$0xf]
        %v1609 = vld [vmem:[%s1601 + $0x1c] sm:$0xf]
        %v1610 = vld [vmem:[%s1601 + $0x20] sm:$0xf]
        %v1611 = vld [vmem:[%s1601 + $0x24] sm:$0xf]
        %v1612 = vld [vmem:[%s1601 + $0x28] sm:$0xf]
        %v1613 = vld [vmem:[%s1601 + $0x2c] sm:$0xf]
        %vm1614 = vsmask.f32 256
        %v1615 = vshrl.u32 %v1536, 16
        %v1617 = vrot.slane %v1615, 7
        %v1618 = vshrl.u32 %v1538, 16
        %v1620 = vrot.slane %v1618, 7
        %v1621 = vshll.u32 %v1538, 16
        %v1623 = vor.u32 %v1620, %v1621
        %v1624 = vsel %vm1614, %v1617, %v1623
        %v1625 = vshrl.u32 %v1540, 16
        %v1627 = vrot.slane %v1625, 7
        %v1628 = vshll.u32 %v1540, 16
        %v1630 = vor.u32 %v1627, %v1628
        %v1631 = vsel %vm1614, %v1620, %v1630
        %v1632 = vshrl.u32 %v1542, 16
        %v1634 = vrot.slane %v1632, 7
        %v1635 = vshll.u32 %v1542, 16
        %v1637 = vor.u32 %v1634, %v1635
        %v1638 = vsel %vm1614, %v1627, %v1637
        %v1639 = vshrl.u32 %v1544, 16
        %v1641 = vrot.slane %v1639, 7
        %v1642 = vshll.u32 %v1544, 16
        %v1644 = vor.u32 %v1641, %v1642
        %v1645 = vsel %vm1614, %v1634, %v1644
        %v1646 = vshrl.u32 %v1546, 16
        %v1648 = vrot.slane %v1646, 7
        %v1649 = vshll.u32 %v1546, 16
        %v1651 = vor.u32 %v1648, %v1649
        %v1652 = vsel %vm1614, %v1641, %v1651
        %v1653 = vshrl.u32 %v1548, 16
        %v1655 = vrot.slane %v1653, 7
        %v1656 = vshll.u32 %v1548, 16
        %v1658 = vor.u32 %v1655, %v1656
        %v1659 = vsel %vm1614, %v1648, %v1658
        %v1660 = vshrl.u32 %v1550, 16
        %v1662 = vrot.slane %v1660, 7
        %v1663 = vshll.u32 %v1550, 16
        %v1665 = vor.u32 %v1662, %v1663
        %v1666 = vsel %vm1614, %v1655, %v1665
        %v1667 = vshrl.u32 %v1552, 16
        %v1669 = vrot.slane %v1667, 7
        %v1670 = vshll.u32 %v1552, 16
        %v1672 = vor.u32 %v1669, %v1670
        %v1673 = vsel %vm1614, %v1662, %v1672
        %v1674 = vshrl.u32 %v1554, 16
        %v1676 = vrot.slane %v1674, 7
        %v1677 = vshll.u32 %v1554, 16
        %v1679 = vor.u32 %v1676, %v1677
        %v1680 = vsel %vm1614, %v1669, %v1679
        %v1681 = vshrl.u32 %v1556, 16
        %v1683 = vrot.slane %v1681, 7
        %v1684 = vshll.u32 %v1556, 16
        %v1686 = vor.u32 %v1683, %v1684
        %v1687 = vsel %vm1614, %v1676, %v1686
        %v1688 = vshrl.u32 %v1558, 16
        %v1690 = vrot.slane %v1688, 7
        %v1691 = vshll.u32 %v1558, 16
        %v1693 = vor.u32 %v1690, %v1691
        %v1694 = vsel %vm1614, %v1683, %v1693
        %v1695 = vshrl.u32 %v1560, 16
        %v1697 = vrot.slane %v1695, 7
        %v1698 = vshll.u32 %v1560, 16
        %v1700 = vor.u32 %v1697, %v1698
        %v1701 = vsel %vm1614, %v1690, %v1700
        %v1702 = vshrl.u32 %v1562, 16
        %v1704 = vrot.slane %v1702, 7
        %v1705 = vshll.u32 %v1562, 16
        %v1707 = vor.u32 %v1704, %v1705
        %v1708 = vsel %vm1614, %v1697, %v1707
        %v1709 = vshrl.u32 %v1564, 16
        %v1711 = vrot.slane %v1709, 7
        %v1712 = vshll.u32 %v1564, 16
        %v1714 = vor.u32 %v1711, %v1712
        %v1715 = vsel %vm1614, %v1704, %v1714
        %v1716 = vshrl.u32 %v1566, 16
        %v1718 = vrot.slane %v1716, 7
        %v1719 = vshll.u32 %v1566, 16
        %v1721 = vor.u32 %v1718, %v1719
        %v1722 = vsel %vm1614, %v1711, %v1721
        %v1723 = vshrl.u32 %v1568, 16
        %v1725 = vrot.slane %v1723, 7
        %v1726 = vshll.u32 %v1568, 16
        %v1728 = vor.u32 %v1725, %v1726
        %v1729 = vsel %vm1614, %v1718, %v1728
        %v1730 = vshrl.u32 %v1570, 16
        %v1732 = vrot.slane %v1730, 7
        %v1733 = vshll.u32 %v1570, 16
        %v1735 = vor.u32 %v1732, %v1733
        %v1736 = vsel %vm1614, %v1725, %v1735
        %v1737 = vshrl.u32 %v1572, 16
        %v1739 = vrot.slane %v1737, 7
        %v1740 = vshll.u32 %v1572, 16
        %v1742 = vor.u32 %v1739, %v1740
        %v1743 = vsel %vm1614, %v1732, %v1742
        %v1744 = vshrl.u32 %v1574, 16
        %v1746 = vrot.slane %v1744, 7
        %v1747 = vshll.u32 %v1574, 16
        %v1749 = vor.u32 %v1746, %v1747
        %v1750 = vsel %vm1614, %v1739, %v1749
        %v1751 = vshrl.u32 %v1576, 16
        %v1753 = vrot.slane %v1751, 7
        %v1754 = vshll.u32 %v1576, 16
        %v1756 = vor.u32 %v1753, %v1754
        %v1757 = vsel %vm1614, %v1746, %v1756
        %v1758 = vshrl.u32 %v1578, 16
        %v1760 = vrot.slane %v1758, 7
        %v1761 = vshll.u32 %v1578, 16
        %v1763 = vor.u32 %v1760, %v1761
        %v1764 = vsel %vm1614, %v1753, %v1763
        %v1765 = vshrl.u32 %v1580, 16
        %v1767 = vrot.slane %v1765, 7
        %v1768 = vshll.u32 %v1580, 16
        %v1770 = vor.u32 %v1767, %v1768
        %v1771 = vsel %vm1614, %v1760, %v1770
        %v1772 = vshrl.u32 %v1582, 16
        %v1774 = vrot.slane %v1772, 7
        %v1775 = vshll.u32 %v1582, 16
        %v1777 = vor.u32 %v1774, %v1775
        %v1778 = vsel %vm1614, %v1767, %v1777
        %v1779 = vshrl.u32 %v1584, 16
        %v1781 = vrot.slane %v1779, 7
        %v1782 = vshll.u32 %v1584, 16
        %v1784 = vor.u32 %v1781, %v1782
        %v1785 = vsel %vm1614, %v1774, %v1784
        %v1798 = vunpack.c.l.b16 %v1602
        %v1799 = vunpack.c.l.b16 %v1603
        %v1800 = vunpack.c.l.b16 %v1604
        %v1801 = vunpack.c.l.b16 %v1605
        %v1802 = vunpack.c.l.b16 %v1606
        %v1803 = vunpack.c.l.b16 %v1607
        %v1804 = vunpack.c.l.b16 %v1608
        %v1805 = vunpack.c.l.b16 %v1609
        %v1806 = vunpack.c.l.b16 %v1610
        %v1807 = vunpack.c.l.b16 %v1611
        %v1808 = vunpack.c.l.b16 %v1612
        %v1809 = vunpack.c.l.b16 %v1613
        %v1810 = vpack.c.b16 %v1799, %v1798
        %v1811 = vpack.c.b16 %v1801, %v1800
        %v1812 = vpack.c.b16 %v1803, %v1802
        %v1813 = vpack.c.b16 %v1805, %v1804
        %v1814 = vpack.c.b16 %v1807, %v1806
        %v1815 = vpack.c.b16 %v1809, %v1808
        %vm1822 = vcmask 785408
        %v1824 = vsel %vm1822, %v1624, 0
        %v1827 = vsel %vm1822, %v1631, 0
        %v1830 = vsel %vm1822, %v1638, 0
        %v1833 = vsel %vm1822, %v1645, 0
        %v1836 = vsel %vm1822, %v1652, 0
        %v1839 = vsel %vm1822, %v1659, 0
        %v1842 = vsel %vm1822, %v1666, 0
        %v1845 = vsel %vm1822, %v1673, 0
        %v1848 = vsel %vm1822, %v1680, 0
        %v1851 = vsel %vm1822, %v1687, 0
        %v1854 = vsel %vm1822, %v1694, 0
        %v1857 = vsel %vm1822, %v1701, 0
        %v1860 = vsel %vm1822, %v1708, 0
        %v1863 = vsel %vm1822, %v1715, 0
        %v1866 = vsel %vm1822, %v1722, 0
        %v1869 = vsel %vm1822, %v1729, 0
        %v1872 = vsel %vm1822, %v1736, 0
        %v1875 = vsel %vm1822, %v1743, 0
        %v1878 = vsel %vm1822, %v1750, 0
        %v1881 = vsel %vm1822, %v1757, 0
        %v1884 = vsel %vm1822, %v1764, 0
        %v1887 = vsel %vm1822, %v1771, 0
        %v1890 = vsel %vm1822, %v1778, 0
        %v1893 = vsel %vm1822, %v1785, 0
        %1895 = vmatpush.bf16.msra.mxu0 0
        %1896 = vmatpush.bf16.msra.mxu0 0
        %1897 = vmatpush.bf16.msra.mxu0 %v1815
        %1898 = vmatpush.bf16.msra.mxu0 %v1814
        %1899 = vmatpush.bf16.msra.mxu0 %v1813
        %1900 = vmatpush.bf16.msra.mxu0 %v1812
        %1901 = vmatpush.bf16.msra.mxu0 %v1811
        %1902 = vmatpush.bf16.msra.mxu0 %v1810
        %1903 = vmatmul.bf16.gmra.mxu0 %v1824
        %v1904 = vpop.f32.mrf.mxu0
        %v1905 = vadd.f32 0.0, %v1904
        %v1906 = vpop.f32.mrf.mxu0
        %v1907 = vadd.f32 0.0, %v1906
        %1908 = vmatmul.bf16.gmra.mxu0 %v1827
        %v1909 = vpop.f32.mrf.mxu0
        %v1910 = vpop.f32.mrf.mxu0
        %v1911 = vadd.f32 0.0, %v1910
        %1912 = vmatmul.bf16.gmra.mxu0 %v1830
        %v1913 = vpop.f32.mrf.mxu0
        %v1914 = vadd.f32 0.0, %v1913
        %v1915 = vpop.f32.mrf.mxu0
        %1916 = vmatmul.bf16.gmra.mxu0 %v1833
        %v1917 = vpop.f32.mrf.mxu0
        %v1918 = vadd.f32 0.0, %v1917
        %v1919 = vpop.f32.mrf.mxu0
        %v1920 = vadd.f32 0.0, %v1919
        %1921 = vmatmul.bf16.gmra.mxu0 %v1836
        %v1922 = vpop.f32.mrf.mxu0
        %v1923 = vpop.f32.mrf.mxu0
        %v1924 = vadd.f32 0.0, %v1923
        %1925 = vmatmul.bf16.gmra.mxu0 %v1839
        %v1926 = vpop.f32.mrf.mxu0
        %v1927 = vadd.f32 0.0, %v1926
        %v1928 = vpop.f32.mrf.mxu0
        %1929 = vmatmul.bf16.gmra.mxu0 %v1842
        %v1930 = vpop.f32.mrf.mxu0
        %v1931 = vadd.f32 0.0, %v1930
        %v1932 = vpop.f32.mrf.mxu0
        %v1933 = vadd.f32 0.0, %v1932
        %1934 = vmatmul.bf16.gmra.mxu0 %v1845
        %v1935 = vpop.f32.mrf.mxu0
        %v1936 = vpop.f32.mrf.mxu0
        %v1937 = vadd.f32 0.0, %v1936
        %1938 = vmatmul.bf16.gmra.mxu0 %v1848
        %v1939 = vpop.f32.mrf.mxu0
        %v1940 = vadd.f32 0.0, %v1939
        %v1941 = vpop.f32.mrf.mxu0
        %1942 = vmatmul.bf16.gmra.mxu0 %v1851
        %v1943 = vpop.f32.mrf.mxu0
        %v1944 = vadd.f32 0.0, %v1943
        %v1945 = vpop.f32.mrf.mxu0
        %v1946 = vadd.f32 0.0, %v1945
        %1947 = vmatmul.bf16.gmra.mxu0 %v1854
        %v1948 = vpop.f32.mrf.mxu0
        %v1949 = vpop.f32.mrf.mxu0
        %v1950 = vadd.f32 0.0, %v1949
        %1951 = vmatmul.bf16.gmra.mxu0 %v1857
        %v1952 = vpop.f32.mrf.mxu0
        %v1953 = vadd.f32 0.0, %v1952
        %v1954 = vpop.f32.mrf.mxu0
        %1955 = vmatmul.bf16.gmra.mxu0 %v1860
        %v1956 = vpop.f32.mrf.mxu0
        %v1957 = vadd.f32 0.0, %v1956
        %v1958 = vpop.f32.mrf.mxu0
        %v1959 = vadd.f32 0.0, %v1958
        %1960 = vmatmul.bf16.gmra.mxu0 %v1863
        %v1961 = vpop.f32.mrf.mxu0
        %v1962 = vpop.f32.mrf.mxu0
        %v1963 = vadd.f32 0.0, %v1962
        %1964 = vmatmul.bf16.gmra.mxu0 %v1866
        %v1965 = vpop.f32.mrf.mxu0
        %v1966 = vadd.f32 0.0, %v1965
        %v1967 = vpop.f32.mrf.mxu0
        %1968 = vmatmul.bf16.gmra.mxu0 %v1869
        %v1969 = vpop.f32.mrf.mxu0
        %v1970 = vadd.f32 0.0, %v1969
        %v1971 = vpop.f32.mrf.mxu0
        %v1972 = vadd.f32 0.0, %v1971
        %1973 = vmatmul.bf16.gmra.mxu0 %v1872
        %v1974 = vpop.f32.mrf.mxu0
        %v1975 = vpop.f32.mrf.mxu0
        %v1976 = vadd.f32 0.0, %v1975
        %1977 = vmatmul.bf16.gmra.mxu0 %v1875
        %v1978 = vpop.f32.mrf.mxu0
        %v1979 = vadd.f32 0.0, %v1978
        %v1980 = vpop.f32.mrf.mxu0
        %1981 = vmatmul.bf16.gmra.mxu0 %v1878
        %v1982 = vpop.f32.mrf.mxu0
        %v1983 = vadd.f32 0.0, %v1982
        %v1984 = vpop.f32.mrf.mxu0
        %v1985 = vadd.f32 0.0, %v1984
        %1986 = vmatmul.bf16.gmra.mxu0 %v1881
        %v1987 = vpop.f32.mrf.mxu0
        %v1988 = vpop.f32.mrf.mxu0
        %v1989 = vadd.f32 0.0, %v1988
        %1990 = vmatmul.bf16.gmra.mxu0 %v1884
        %v1991 = vpop.f32.mrf.mxu0
        %v1992 = vadd.f32 0.0, %v1991
        %v1993 = vpop.f32.mrf.mxu0
        %1994 = vmatmul.bf16.gmra.mxu0 %v1887
        %v1995 = vpop.f32.mrf.mxu0
        %v1996 = vadd.f32 0.0, %v1995
        %v1997 = vpop.f32.mrf.mxu0
        %v1998 = vadd.f32 0.0, %v1997
        %1999 = vmatmul.bf16.gmra.mxu0 %v1890
        %v2000 = vpop.f32.mrf.mxu0
        %v2001 = vpop.f32.mrf.mxu0
        %v2002 = vadd.f32 0.0, %v2001
        %2003 = vmatmul.bf16.gmra.mxu0 %v1893
        %v2004 = vpop.f32.mrf.mxu0
        %v2005 = vadd.f32 0.0, %v2004
        %v2006 = vpop.f32.mrf.mxu0
        %2007 = vdwg.mxu0
        %vm2008 = vsmask.f32 4352
        %v2009 = vshrl.u32 %v1534, 16
        %v2011 = vrot.slane %v2009, 3
        %v2012 = vshll.u32 %v1534, 16
        %v2014 = vrot.slane %v2012, 4
        %v2015 = vor.u32 %v2011, %v2014
        %v2016 = vrot.slane %v1615, 3
        %v2017 = vshll.u32 %v1536, 16
        %v2019 = vrot.slane %v2017, 4
        %v2020 = vor.u32 %v2016, %v2019
        %v2021 = vsel %vm2008, %v2015, %v2020
        %v2022 = vrot.slane %v1618, 3
        %v2023 = vrot.slane %v1621, 4
        %v2024 = vor.u32 %v2022, %v2023
        %v2025 = vsel %vm2008, %v2020, %v2024
        %v2026 = vrot.slane %v1625, 3
        %v2027 = vrot.slane %v1628, 4
        %v2028 = vor.u32 %v2026, %v2027
        %v2029 = vsel %vm2008, %v2024, %v2028
        %v2030 = vrot.slane %v1632, 3
        %v2031 = vrot.slane %v1635, 4
        %v2032 = vor.u32 %v2030, %v2031
        %v2033 = vsel %vm2008, %v2028, %v2032
        %v2034 = vrot.slane %v1639, 3
        %v2035 = vrot.slane %v1642, 4
        %v2036 = vor.u32 %v2034, %v2035
        %v2037 = vsel %vm2008, %v2032, %v2036
        %v2038 = vrot.slane %v1646, 3
        %v2039 = vrot.slane %v1649, 4
        %v2040 = vor.u32 %v2038, %v2039
        %v2041 = vsel %vm2008, %v2036, %v2040
        %v2042 = vrot.slane %v1653, 3
        %v2043 = vrot.slane %v1656, 4
        %v2044 = vor.u32 %v2042, %v2043
        %v2045 = vsel %vm2008, %v2040, %v2044
        %v2046 = vrot.slane %v1660, 3
        %v2047 = vrot.slane %v1663, 4
        %v2048 = vor.u32 %v2046, %v2047
        %v2049 = vsel %vm2008, %v2044, %v2048
        %v2050 = vrot.slane %v1667, 3
        %v2051 = vrot.slane %v1670, 4
        %v2052 = vor.u32 %v2050, %v2051
        %v2053 = vsel %vm2008, %v2048, %v2052
        %v2054 = vrot.slane %v1674, 3
        %v2055 = vrot.slane %v1677, 4
        %v2056 = vor.u32 %v2054, %v2055
        %v2057 = vsel %vm2008, %v2052, %v2056
        %v2058 = vrot.slane %v1681, 3
        %v2059 = vrot.slane %v1684, 4
        %v2060 = vor.u32 %v2058, %v2059
        %v2061 = vsel %vm2008, %v2056, %v2060
        %v2062 = vrot.slane %v1688, 3
        %v2063 = vrot.slane %v1691, 4
        %v2064 = vor.u32 %v2062, %v2063
        %v2065 = vsel %vm2008, %v2060, %v2064
        %v2066 = vrot.slane %v1695, 3
        %v2067 = vrot.slane %v1698, 4
        %v2068 = vor.u32 %v2066, %v2067
        %v2069 = vsel %vm2008, %v2064, %v2068
        %v2070 = vrot.slane %v1702, 3
        %v2071 = vrot.slane %v1705, 4
        %v2072 = vor.u32 %v2070, %v2071
        %v2073 = vsel %vm2008, %v2068, %v2072
        %v2074 = vrot.slane %v1709, 3
        %v2075 = vrot.slane %v1712, 4
        %v2076 = vor.u32 %v2074, %v2075
        %v2077 = vsel %vm2008, %v2072, %v2076
        %v2078 = vrot.slane %v1716, 3
        %v2079 = vrot.slane %v1719, 4
        %v2080 = vor.u32 %v2078, %v2079
        %v2081 = vsel %vm2008, %v2076, %v2080
        %v2082 = vrot.slane %v1723, 3
        %v2083 = vrot.slane %v1726, 4
        %v2084 = vor.u32 %v2082, %v2083
        %v2085 = vsel %vm2008, %v2080, %v2084
        %v2086 = vrot.slane %v1730, 3
        %v2087 = vrot.slane %v1733, 4
        %v2088 = vor.u32 %v2086, %v2087
        %v2089 = vsel %vm2008, %v2084, %v2088
        %v2090 = vrot.slane %v1737, 3
        %v2091 = vrot.slane %v1740, 4
        %v2092 = vor.u32 %v2090, %v2091
        %v2093 = vsel %vm2008, %v2088, %v2092
        %v2094 = vrot.slane %v1744, 3
        %v2095 = vrot.slane %v1747, 4
        %v2096 = vor.u32 %v2094, %v2095
        %v2097 = vsel %vm2008, %v2092, %v2096
        %v2098 = vrot.slane %v1751, 3
        %v2099 = vrot.slane %v1754, 4
        %v2100 = vor.u32 %v2098, %v2099
        %v2101 = vsel %vm2008, %v2096, %v2100
        %v2102 = vrot.slane %v1758, 3
        %v2103 = vrot.slane %v1761, 4
        %v2104 = vor.u32 %v2102, %v2103
        %v2105 = vsel %vm2008, %v2100, %v2104
        %v2106 = vrot.slane %v1765, 3
        %v2107 = vrot.slane %v1768, 4
        %v2108 = vor.u32 %v2106, %v2107
        %v2109 = vsel %vm2008, %v2104, %v2108
        %v2110 = vrot.slane %v1772, 3
        %v2111 = vrot.slane %v1775, 4
        %v2112 = vor.u32 %v2110, %v2111
        %v2113 = vsel %vm2008, %v2108, %v2112
        %v2126 = vunpack.c.l.b16 %v1589
        %v2127 = vunpack.c.l.b16 %v1590
        %v2128 = vunpack.c.l.b16 %v1591
        %v2129 = vunpack.c.l.b16 %v1592
        %v2130 = vunpack.c.l.b16 %v1593
        %v2131 = vunpack.c.l.b16 %v1594
        %v2132 = vunpack.c.l.b16 %v1595
        %v2133 = vunpack.c.l.b16 %v1596
        %v2134 = vunpack.c.l.b16 %v1597
        %v2135 = vunpack.c.l.b16 %v1598
        %v2136 = vunpack.c.l.b16 %v1599
        %v2137 = vunpack.c.l.b16 %v1600
        %v2138 = vpack.c.b16 %v2127, %v2126
        %v2139 = vpack.c.b16 %v2129, %v2128
        %v2140 = vpack.c.b16 %v2131, %v2130
        %v2141 = vpack.c.b16 %v2133, %v2132
        %v2142 = vpack.c.b16 %v2135, %v2134
        %v2143 = vpack.c.b16 %v2137, %v2136
        %v2151 = vsel %vm1822, %v2021, 0
        %v2154 = vsel %vm1822, %v2025, 0
        %v2157 = vsel %vm1822, %v2029, 0
        %v2160 = vsel %vm1822, %v2033, 0
        %v2163 = vsel %vm1822, %v2037, 0
        %v2166 = vsel %vm1822, %v2041, 0
        %v2169 = vsel %vm1822, %v2045, 0
        %v2172 = vsel %vm1822, %v2049, 0
        %v2175 = vsel %vm1822, %v2053, 0
        %v2178 = vsel %vm1822, %v2057, 0
        %v2181 = vsel %vm1822, %v2061, 0
        %v2184 = vsel %vm1822, %v2065, 0
        %v2187 = vsel %vm1822, %v2069, 0
        %v2190 = vsel %vm1822, %v2073, 0
        %v2193 = vsel %vm1822, %v2077, 0
        %v2196 = vsel %vm1822, %v2081, 0
        %v2199 = vsel %vm1822, %v2085, 0
        %v2202 = vsel %vm1822, %v2089, 0
        %v2205 = vsel %vm1822, %v2093, 0
        %v2208 = vsel %vm1822, %v2097, 0
        %v2211 = vsel %vm1822, %v2101, 0
        %v2214 = vsel %vm1822, %v2105, 0
        %v2217 = vsel %vm1822, %v2109, 0
        %v2220 = vsel %vm1822, %v2113, 0
        %2222 = vmatpush.bf16.msra.mxu0 0
        %2223 = vmatpush.bf16.msra.mxu0 0
        %2224 = vmatpush.bf16.msra.mxu0 %v2143
        %2225 = vmatpush.bf16.msra.mxu0 %v2142
        %2226 = vmatpush.bf16.msra.mxu0 %v2141
        %2227 = vmatpush.bf16.msra.mxu0 %v2140
        %2228 = vmatpush.bf16.msra.mxu0 %v2139
        %2229 = vmatpush.bf16.msra.mxu0 %v2138
        %2230 = vmatmul.bf16.gmra.mxu0 %v2151
        %v2231 = vpop.f32.mrf.mxu0
        %v2232 = vadd.f32 %v1905, %v2231
        %v2233 = vpop.f32.mrf.mxu0
        %v2234 = vadd.f32 %v1907, %v2233
        %2235 = vmatmul.bf16.gmra.mxu0 %v2154
        %v2236 = vpop.f32.mrf.mxu0
        %v2237 = vpop.f32.mrf.mxu0
        %v2238 = vadd.f32 %v1911, %v2237
        %2239 = vmatmul.bf16.gmra.mxu0 %v2157
        %v2240 = vpop.f32.mrf.mxu0
        %v2241 = vadd.f32 %v1914, %v2240
        %v2242 = vpop.f32.mrf.mxu0
        %2243 = vmatmul.bf16.gmra.mxu0 %v2160
        %v2244 = vpop.f32.mrf.mxu0
        %v2245 = vadd.f32 %v1918, %v2244
        %v2246 = vpop.f32.mrf.mxu0
        %v2247 = vadd.f32 %v1920, %v2246
        %2248 = vmatmul.bf16.gmra.mxu0 %v2163
        %v2249 = vpop.f32.mrf.mxu0
        %v2250 = vpop.f32.mrf.mxu0
        %v2251 = vadd.f32 %v1924, %v2250
        %2252 = vmatmul.bf16.gmra.mxu0 %v2166
        %v2253 = vpop.f32.mrf.mxu0
        %v2254 = vadd.f32 %v1927, %v2253
        %v2255 = vpop.f32.mrf.mxu0
        %2256 = vmatmul.bf16.gmra.mxu0 %v2169
        %v2257 = vpop.f32.mrf.mxu0
        %v2258 = vadd.f32 %v1931, %v2257
        %v2259 = vpop.f32.mrf.mxu0
        %v2260 = vadd.f32 %v1933, %v2259
        %2261 = vmatmul.bf16.gmra.mxu0 %v2172
        %v2262 = vpop.f32.mrf.mxu0
        %v2263 = vpop.f32.mrf.mxu0
        %v2264 = vadd.f32 %v1937, %v2263
        %2265 = vmatmul.bf16.gmra.mxu0 %v2175
        %v2266 = vpop.f32.mrf.mxu0
        %v2267 = vadd.f32 %v1940, %v2266
        %v2268 = vpop.f32.mrf.mxu0
        %2269 = vmatmul.bf16.gmra.mxu0 %v2178
        %v2270 = vpop.f32.mrf.mxu0
        %v2271 = vadd.f32 %v1944, %v2270
        %v2272 = vpop.f32.mrf.mxu0
        %v2273 = vadd.f32 %v1946, %v2272
        %2274 = vmatmul.bf16.gmra.mxu0 %v2181
        %v2275 = vpop.f32.mrf.mxu0
        %v2276 = vpop.f32.mrf.mxu0
        %v2277 = vadd.f32 %v1950, %v2276
        %2278 = vmatmul.bf16.gmra.mxu0 %v2184
        %v2279 = vpop.f32.mrf.mxu0
        %v2280 = vadd.f32 %v1953, %v2279
        %v2281 = vpop.f32.mrf.mxu0
        %2282 = vmatmul.bf16.gmra.mxu0 %v2187
        %v2283 = vpop.f32.mrf.mxu0
        %v2284 = vadd.f32 %v1957, %v2283
        %v2285 = vpop.f32.mrf.mxu0
        %v2286 = vadd.f32 %v1959, %v2285
        %2287 = vmatmul.bf16.gmra.mxu0 %v2190
        %v2288 = vpop.f32.mrf.mxu0
        %v2289 = vpop.f32.mrf.mxu0
        %v2290 = vadd.f32 %v1963, %v2289
        %2291 = vmatmul.bf16.gmra.mxu0 %v2193
        %v2292 = vpop.f32.mrf.mxu0
        %v2293 = vadd.f32 %v1966, %v2292
        %v2294 = vpop.f32.mrf.mxu0
        %2295 = vmatmul.bf16.gmra.mxu0 %v2196
        %v2296 = vpop.f32.mrf.mxu0
        %v2297 = vadd.f32 %v1970, %v2296
        %v2298 = vpop.f32.mrf.mxu0
        %v2299 = vadd.f32 %v1972, %v2298
        %2300 = vmatmul.bf16.gmra.mxu0 %v2199
        %v2301 = vpop.f32.mrf.mxu0
        %v2302 = vpop.f32.mrf.mxu0
        %v2303 = vadd.f32 %v1976, %v2302
        %2304 = vmatmul.bf16.gmra.mxu0 %v2202
        %v2305 = vpop.f32.mrf.mxu0
        %v2306 = vadd.f32 %v1979, %v2305
        %v2307 = vpop.f32.mrf.mxu0
        %2308 = vmatmul.bf16.gmra.mxu0 %v2205
        %v2309 = vpop.f32.mrf.mxu0
        %v2310 = vadd.f32 %v1983, %v2309
        %v2311 = vpop.f32.mrf.mxu0
        %v2312 = vadd.f32 %v1985, %v2311
        %2313 = vmatmul.bf16.gmra.mxu0 %v2208
        %v2314 = vpop.f32.mrf.mxu0
        %v2315 = vpop.f32.mrf.mxu0
        %v2316 = vadd.f32 %v1989, %v2315
        %2317 = vmatmul.bf16.gmra.mxu0 %v2211
        %v2318 = vpop.f32.mrf.mxu0
        %v2319 = vadd.f32 %v1992, %v2318
        %v2320 = vpop.f32.mrf.mxu0
        %2321 = vmatmul.bf16.gmra.mxu0 %v2214
        %v2322 = vpop.f32.mrf.mxu0
        %v2323 = vadd.f32 %v1996, %v2322
        %v2324 = vpop.f32.mrf.mxu0
        %v2325 = vadd.f32 %v1998, %v2324
        %2326 = vmatmul.bf16.gmra.mxu0 %v2217
        %v2327 = vpop.f32.mrf.mxu0
        %v2328 = vpop.f32.mrf.mxu0
        %v2329 = vadd.f32 %v2002, %v2328
        %2330 = vmatmul.bf16.gmra.mxu0 %v2220
        %v2331 = vpop.f32.mrf.mxu0
        %v2332 = vadd.f32 %v2005, %v2331
        %v2333 = vpop.f32.mrf.mxu0
        %2334 = vdwg.mxu0
        %s2335 = scalar_lea.vmem %s3, 96
        %v2336 = vld [vmem:[%s2335] sm:$0xf]
        %v2337 = vld [vmem:[%s2335 + $0x4] sm:$0xf]
        %v2338 = vld [vmem:[%s2335 + $0x8] sm:$0xf]
        %v2339 = vld [vmem:[%s2335 + $0xc] sm:$0xf]
        %v2340 = vld [vmem:[%s2335 + $0x10] sm:$0xf]
        %v2341 = vld [vmem:[%s2335 + $0x14] sm:$0xf]
        %v2342 = vld [vmem:[%s2335 + $0x18] sm:$0xf]
        %v2343 = vld [vmem:[%s2335 + $0x1c] sm:$0xf]
        %v2344 = vld [vmem:[%s2335 + $0x20] sm:$0xf]
        %v2345 = vld [vmem:[%s2335 + $0x24] sm:$0xf]
        %v2346 = vld [vmem:[%s2335 + $0x28] sm:$0xf]
        %v2347 = vld [vmem:[%s2335 + $0x2c] sm:$0xf]
        %v2348 = vrot.slane %v1779, 3
        %v2349 = vrot.slane %v1782, 4
        %v2350 = vor.u32 %v2348, %v2349
        %v2351 = vsel %vm2008, %v2112, %v2350
        %v2352 = vshrl.u32 %v1586, 16
        %v2354 = vrot.slane %v2352, 3
        %v2355 = vshll.u32 %v1586, 16
        %v2357 = vrot.slane %v2355, 4
        %v2358 = vor.u32 %v2354, %v2357
        %v2359 = vsel %vm2008, %v2350, %v2358
        %v2360 = vshrl.u32 %v1588, 16
        %v2362 = vrot.slane %v2360, 3
        %v2363 = vshll.u32 %v1588, 16
        %v2365 = vrot.slane %v2363, 4
        %v2366 = vor.u32 %v2362, %v2365
        %v2367 = vsel %vm2008, %v2358, %v2366
        %v2380 = vunpack.c.l.b16 %v2336
        %v2381 = vunpack.c.l.b16 %v2337
        %v2382 = vunpack.c.l.b16 %v2338
        %v2383 = vunpack.c.l.b16 %v2339
        %v2384 = vunpack.c.l.b16 %v2340
        %v2385 = vunpack.c.l.b16 %v2341
        %v2386 = vunpack.c.l.b16 %v2342
        %v2387 = vunpack.c.l.b16 %v2343
        %v2388 = vunpack.c.l.b16 %v2344
        %v2389 = vunpack.c.l.b16 %v2345
        %v2390 = vunpack.c.l.b16 %v2346
        %v2391 = vunpack.c.l.b16 %v2347
        %v2392 = vpack.c.b16 %v2381, %v2380
        %v2393 = vpack.c.b16 %v2383, %v2382
        %v2394 = vpack.c.b16 %v2385, %v2384
        %v2395 = vpack.c.b16 %v2387, %v2386
        %v2396 = vpack.c.b16 %v2389, %v2388
        %v2397 = vpack.c.b16 %v2391, %v2390
        %v2405 = vsel %vm1822, %v2351, 0
        %v2408 = vsel %vm1822, %v2359, 0
        %v2411 = vsel %vm1822, %v2367, 0
        %2413 = vmatpush.bf16.msra.mxu0 0
        %2414 = vmatpush.bf16.msra.mxu0 0
        %2415 = vmatpush.bf16.msra.mxu0 %v2397
        %2416 = vmatpush.bf16.msra.mxu0 %v2396
        %2417 = vmatpush.bf16.msra.mxu0 %v2395
        %2418 = vmatpush.bf16.msra.mxu0 %v2394
        %2419 = vmatpush.bf16.msra.mxu0 %v2393
        %2420 = vmatpush.bf16.msra.mxu0 %v2392
        %2421 = vmatmul.bf16.gmra.mxu0 %v2160
        %v2422 = vpop.f32.mrf.mxu0
        %v2423 = vadd.f32 0.0, %v2422
        %v2424 = vpop.f32.mrf.mxu0
        %v2425 = vadd.f32 0.0, %v2424
        %2426 = vmatmul.bf16.gmra.mxu0 %v2163
        %v2427 = vpop.f32.mrf.mxu0
        %v2428 = vpop.f32.mrf.mxu0
        %v2429 = vadd.f32 0.0, %v2428
        %2430 = vmatmul.bf16.gmra.mxu0 %v2166
        %v2431 = vpop.f32.mrf.mxu0
        %v2432 = vadd.f32 0.0, %v2431
        %v2433 = vpop.f32.mrf.mxu0
        %2434 = vmatmul.bf16.gmra.mxu0 %v2169
        %v2435 = vpop.f32.mrf.mxu0
        %v2436 = vadd.f32 0.0, %v2435
        %v2437 = vpop.f32.mrf.mxu0
        %v2438 = vadd.f32 0.0, %v2437
        %2439 = vmatmul.bf16.gmra.mxu0 %v2172
        %v2440 = vpop.f32.mrf.mxu0
        %v2441 = vpop.f32.mrf.mxu0
        %v2442 = vadd.f32 0.0, %v2441
        %2443 = vmatmul.bf16.gmra.mxu0 %v2175
        %v2444 = vpop.f32.mrf.mxu0
        %v2445 = vadd.f32 0.0, %v2444
        %v2446 = vpop.f32.mrf.mxu0
        %2447 = vmatmul.bf16.gmra.mxu0 %v2178
        %v2448 = vpop.f32.mrf.mxu0
        %v2449 = vadd.f32 0.0, %v2448
        %v2450 = vpop.f32.mrf.mxu0
        %v2451 = vadd.f32 0.0, %v2450
        %2452 = vmatmul.bf16.gmra.mxu0 %v2181
        %v2453 = vpop.f32.mrf.mxu0
        %v2454 = vpop.f32.mrf.mxu0
        %v2455 = vadd.f32 0.0, %v2454
        %2456 = vmatmul.bf16.gmra.mxu0 %v2184
        %v2457 = vpop.f32.mrf.mxu0
        %v2458 = vadd.f32 0.0, %v2457
        %v2459 = vpop.f32.mrf.mxu0
        %2460 = vmatmul.bf16.gmra.mxu0 %v2187
        %v2461 = vpop.f32.mrf.mxu0
        %v2462 = vadd.f32 0.0, %v2461
        %v2463 = vpop.f32.mrf.mxu0
        %v2464 = vadd.f32 0.0, %v2463
        %2465 = vmatmul.bf16.gmra.mxu0 %v2190
        %v2466 = vpop.f32.mrf.mxu0
        %v2467 = vpop.f32.mrf.mxu0
        %v2468 = vadd.f32 0.0, %v2467
        %2469 = vmatmul.bf16.gmra.mxu0 %v2193
        %v2470 = vpop.f32.mrf.mxu0
        %v2471 = vadd.f32 0.0, %v2470
        %v2472 = vpop.f32.mrf.mxu0
        %2473 = vmatmul.bf16.gmra.mxu0 %v2196
        %v2474 = vpop.f32.mrf.mxu0
        %v2475 = vadd.f32 0.0, %v2474
        %v2476 = vpop.f32.mrf.mxu0
        %v2477 = vadd.f32 0.0, %v2476
        %2478 = vmatmul.bf16.gmra.mxu0 %v2199
        %v2479 = vpop.f32.mrf.mxu0
        %v2480 = vpop.f32.mrf.mxu0
        %v2481 = vadd.f32 0.0, %v2480
        %2482 = vmatmul.bf16.gmra.mxu0 %v2202
        %v2483 = vpop.f32.mrf.mxu0
        %v2484 = vadd.f32 0.0, %v2483
        %v2485 = vpop.f32.mrf.mxu0
        %2486 = vmatmul.bf16.gmra.mxu0 %v2205
        %v2487 = vpop.f32.mrf.mxu0
        %v2488 = vadd.f32 0.0, %v2487
        %v2489 = vpop.f32.mrf.mxu0
        %v2490 = vadd.f32 0.0, %v2489
        %2491 = vmatmul.bf16.gmra.mxu0 %v2208
        %v2492 = vpop.f32.mrf.mxu0
        %v2493 = vpop.f32.mrf.mxu0
        %v2494 = vadd.f32 0.0, %v2493
        %2495 = vmatmul.bf16.gmra.mxu0 %v2211
        %v2496 = vpop.f32.mrf.mxu0
        %v2497 = vadd.f32 0.0, %v2496
        %v2498 = vpop.f32.mrf.mxu0
        %2499 = vmatmul.bf16.gmra.mxu0 %v2214
        %v2500 = vpop.f32.mrf.mxu0
        %v2501 = vadd.f32 0.0, %v2500
        %v2502 = vpop.f32.mrf.mxu0
        %v2503 = vadd.f32 0.0, %v2502
        %2504 = vmatmul.bf16.gmra.mxu0 %v2217
        %v2505 = vpop.f32.mrf.mxu0
        %v2506 = vpop.f32.mrf.mxu0
        %v2507 = vadd.f32 0.0, %v2506
        %2508 = vmatmul.bf16.gmra.mxu0 %v2220
        %v2509 = vpop.f32.mrf.mxu0
        %v2510 = vadd.f32 0.0, %v2509
        %v2511 = vpop.f32.mrf.mxu0
        %2512 = vmatmul.bf16.gmra.mxu0 %v2405
        %v2513 = vpop.f32.mrf.mxu0
        %v2514 = vadd.f32 0.0, %v2513
        %v2515 = vpop.f32.mrf.mxu0
        %v2516 = vadd.f32 0.0, %v2515
        %2517 = vmatmul.bf16.gmra.mxu0 %v2408
        %v2518 = vpop.f32.mrf.mxu0
        %v2519 = vpop.f32.mrf.mxu0
        %v2520 = vadd.f32 0.0, %v2519
        %2521 = vmatmul.bf16.gmra.mxu0 %v2411
        %v2522 = vpop.f32.mrf.mxu0
        %v2523 = vadd.f32 0.0, %v2522
        %v2524 = vpop.f32.mrf.mxu0
        %2525 = vdwg.mxu0
        %v2526 = vadd.f32 %v2232, %v2423
        %v2527 = vadd.f32 %v2234, %v2425
        %v2528 = vadd.f32 %v2238, %v2429
        %v2529 = vadd.f32 %v2241, %v2432
        %v2530 = vadd.f32 %v2245, %v2436
        %v2531 = vadd.f32 %v2247, %v2438
        %v2532 = vadd.f32 %v2251, %v2442
        %v2533 = vadd.f32 %v2254, %v2445
        %v2534 = vadd.f32 %v2258, %v2449
        %v2535 = vadd.f32 %v2260, %v2451
        %v2536 = vadd.f32 %v2264, %v2455
        %v2537 = vadd.f32 %v2267, %v2458
        %v2538 = vadd.f32 %v2271, %v2462
        %v2539 = vadd.f32 %v2273, %v2464
        %v2540 = vadd.f32 %v2277, %v2468
        %v2541 = vadd.f32 %v2280, %v2471
        %v2542 = vadd.f32 %v2284, %v2475
        %v2543 = vadd.f32 %v2286, %v2477
        %v2544 = vadd.f32 %v2290, %v2481
        %v2545 = vadd.f32 %v2293, %v2484
        %v2546 = vadd.f32 %v2297, %v2488
        %v2547 = vadd.f32 %v2299, %v2490
        %v2548 = vadd.f32 %v2303, %v2494
        %v2549 = vadd.f32 %v2306, %v2497
        %v2550 = vadd.f32 %v2310, %v2501
        %v2551 = vadd.f32 %v2312, %v2503
        %v2552 = vadd.f32 %v2316, %v2507
        %v2553 = vadd.f32 %v2319, %v2510
        %v2554 = vadd.f32 %v2323, %v2514
        %v2555 = vadd.f32 %v2325, %v2516
        %v2556 = vadd.f32 %v2329, %v2520
        %v2557 = vadd.f32 %v2332, %v2523
        %v2558 = vld [vmem:[%s4] sm:$0x1]
        %v2560 = vperm.slane %v2558, 0
        %v2562 = vadd.f32 %v2526, %v2560
        %v2563 = vadd.f32 %v2527, %v2560
        %v2564 = vadd.f32 %v2528, %v2560
        %v2565 = vadd.f32 %v2529, %v2560
        %v2566 = vadd.f32 %v2530, %v2560
        %v2567 = vadd.f32 %v2531, %v2560
        %v2568 = vadd.f32 %v2532, %v2560
        %v2569 = vadd.f32 %v2533, %v2560
        %v2570 = vadd.f32 %v2534, %v2560
        %v2571 = vadd.f32 %v2535, %v2560
        %v2572 = vadd.f32 %v2536, %v2560
        %v2573 = vadd.f32 %v2537, %v2560
        %v2574 = vadd.f32 %v2538, %v2560
        %v2575 = vadd.f32 %v2539, %v2560
        %v2576 = vadd.f32 %v2540, %v2560
        %v2577 = vadd.f32 %v2541, %v2560
        %v2578 = vadd.f32 %v2542, %v2560
        %v2579 = vadd.f32 %v2543, %v2560
        %v2580 = vadd.f32 %v2544, %v2560
        %v2581 = vadd.f32 %v2545, %v2560
        %v2582 = vadd.f32 %v2546, %v2560
        %v2583 = vadd.f32 %v2547, %v2560
        %v2584 = vadd.f32 %v2548, %v2560
        %v2585 = vadd.f32 %v2549, %v2560
        %v2586 = vadd.f32 %v2550, %v2560
        %v2587 = vadd.f32 %v2551, %v2560
        %v2588 = vadd.f32 %v2552, %v2560
        %v2589 = vadd.f32 %v2553, %v2560
        %v2590 = vadd.f32 %v2554, %v2560
        %v2591 = vadd.f32 %v2555, %v2560
        %v2592 = vadd.f32 %v2556, %v2560
        %v2593 = vadd.f32 %v2557, %v2560
        %v2594 = vmax.f32 %v2562, 0.0
        %v2595 = vmax.f32 %v2563, 0.0
        %v2596 = vmax.f32 %v2564, 0.0
        %v2597 = vmax.f32 %v2565, 0.0
        %v2598 = vmax.f32 %v2566, 0.0
        %v2599 = vmax.f32 %v2567, 0.0
        %v2600 = vmax.f32 %v2568, 0.0
        %v2601 = vmax.f32 %v2569, 0.0
        %v2602 = vmax.f32 %v2570, 0.0
        %v2603 = vmax.f32 %v2571, 0.0
        %v2604 = vmax.f32 %v2572, 0.0
        %v2605 = vmax.f32 %v2573, 0.0
        %v2606 = vmax.f32 %v2574, 0.0
        %v2607 = vmax.f32 %v2575, 0.0
        %v2608 = vmax.f32 %v2576, 0.0
        %v2609 = vmax.f32 %v2577, 0.0
        %v2610 = vmax.f32 %v2578, 0.0
        %v2611 = vmax.f32 %v2579, 0.0
        %v2612 = vmax.f32 %v2580, 0.0
        %v2613 = vmax.f32 %v2581, 0.0
        %v2614 = vmax.f32 %v2582, 0.0
        %v2615 = vmax.f32 %v2583, 0.0
        %v2616 = vmax.f32 %v2584, 0.0
        %v2617 = vmax.f32 %v2585, 0.0
        %v2618 = vmax.f32 %v2586, 0.0
        %v2619 = vmax.f32 %v2587, 0.0
        %v2620 = vmax.f32 %v2588, 0.0
        %v2621 = vmax.f32 %v2589, 0.0
        %v2622 = vmax.f32 %v2590, 0.0
        %v2623 = vmax.f32 %v2591, 0.0
        %v2624 = vmax.f32 %v2592, 0.0
        %v2625 = vmax.f32 %v2593, 0.0
        %v2626 = vpack.c.bf16 %v2595, %v2594
        %v2627 = vpack.c.bf16 %v2597, %v2596
        %v2628 = vpack.c.bf16 %v2599, %v2598
        %v2629 = vpack.c.bf16 %v2601, %v2600
        %v2630 = vpack.c.bf16 %v2603, %v2602
        %v2631 = vpack.c.bf16 %v2605, %v2604
        %v2632 = vpack.c.bf16 %v2607, %v2606
        %v2633 = vpack.c.bf16 %v2609, %v2608
        %v2634 = vpack.c.bf16 %v2611, %v2610
        %v2635 = vpack.c.bf16 %v2613, %v2612
        %v2636 = vpack.c.bf16 %v2615, %v2614
        %v2637 = vpack.c.bf16 %v2617, %v2616
        %v2638 = vpack.c.bf16 %v2619, %v2618
        %v2639 = vpack.c.bf16 %v2621, %v2620
        %v2640 = vpack.c.bf16 %v2623, %v2622
        %v2641 = vpack.c.bf16 %v2625, %v2624
        %v2642 = vld [vmem:[%s5] sm:$0xf]
        %v2643 = vld [vmem:[%s5 + $0x4] sm:$0xf]
        %v2644 = vld [vmem:[%s5 + $0x8] sm:$0xf]
        %v2645 = vld [vmem:[%s5 + $0xc] sm:$0xf]
        %v2646 = vld [vmem:[%s6] sm:$0x1]
        %v2648 = vperm.slane %v2646, 0
        %v2654 = vunpack.c.l.b16 %v2642
        %v2655 = vunpack.c.l.b16 %v2643
        %v2656 = vunpack.c.l.b16 %v2644
        %v2657 = vunpack.c.l.b16 %v2645
        %v2658 = vpack.c.b16 %v2655, %v2654
        %v2659 = vpack.c.b16 %v2657, %v2656
        %v2663 = vsel %vm1447, %v2626, 0
        %v2666 = vsel %vm1447, %v2627, 0
        %v2669 = vsel %vm1447, %v2628, 0
        %v2672 = vsel %vm1447, %v2629, 0
        %v2675 = vsel %vm1447, %v2630, 0
        %v2678 = vsel %vm1447, %v2631, 0
        %v2681 = vsel %vm1447, %v2632, 0
        %v2684 = vsel %vm1447, %v2633, 0
        %v2687 = vsel %vm1447, %v2634, 0
        %v2690 = vsel %vm1447, %v2635, 0
        %v2693 = vsel %vm1447, %v2636, 0
        %v2696 = vsel %vm1447, %v2637, 0
        %v2699 = vsel %vm1447, %v2638, 0
        %v2702 = vsel %vm1447, %v2639, 0
        %v2705 = vsel %vm1447, %v2640, 0
        %v2708 = vsel %vm1447, %v2641, 0
        %2710 = vmatpush.bf16.msra.mxu0 0
        %2711 = vmatpush.bf16.msra.mxu0 0
        %2712 = vmatpush.bf16.msra.mxu0 0
        %2713 = vmatpush.bf16.msra.mxu0 0
        %2714 = vmatpush.bf16.msra.mxu0 0
        %2715 = vmatpush.bf16.msra.mxu0 0
        %2716 = vmatpush.bf16.msra.mxu0 %v2659
        %2717 = vmatpush.bf16.msra.mxu0 %v2658
        %2718 = vmatmul.bf16.gmra.mxu0 %v2663
        %v2719 = vpop.f32.mrf.mxu0
        %v2720 = vadd.f32 %v2648, %v2719
        %v2721 = vpop.f32.mrf.mxu0
        %v2722 = vadd.f32 %v2648, %v2721
        %2723 = vmatmul.bf16.gmra.mxu0 %v2666
        %v2724 = vpop.f32.mrf.mxu0
        %v2725 = vadd.f32 %v2648, %v2724
        %v2726 = vpop.f32.mrf.mxu0
        %v2727 = vadd.f32 %v2648, %v2726
        %2728 = vmatmul.bf16.gmra.mxu0 %v2669
        %v2729 = vpop.f32.mrf.mxu0
        %v2730 = vadd.f32 %v2648, %v2729
        %v2731 = vpop.f32.mrf.mxu0
        %v2732 = vadd.f32 %v2648, %v2731
        %2733 = vmatmul.bf16.gmra.mxu0 %v2672
        %v2734 = vpop.f32.mrf.mxu0
        %v2735 = vadd.f32 %v2648, %v2734
        %v2736 = vpop.f32.mrf.mxu0
        %v2737 = vadd.f32 %v2648, %v2736
        %2738 = vmatmul.bf16.gmra.mxu0 %v2675
        %v2739 = vpop.f32.mrf.mxu0
        %v2740 = vadd.f32 %v2648, %v2739
        %v2741 = vpop.f32.mrf.mxu0
        %v2742 = vadd.f32 %v2648, %v2741
        %2743 = vmatmul.bf16.gmra.mxu0 %v2678
        %v2744 = vpop.f32.mrf.mxu0
        %v2745 = vadd.f32 %v2648, %v2744
        %v2746 = vpop.f32.mrf.mxu0
        %v2747 = vadd.f32 %v2648, %v2746
        %2748 = vmatmul.bf16.gmra.mxu0 %v2681
        %v2749 = vpop.f32.mrf.mxu0
        %v2750 = vadd.f32 %v2648, %v2749
        %v2751 = vpop.f32.mrf.mxu0
        %v2752 = vadd.f32 %v2648, %v2751
        %2753 = vmatmul.bf16.gmra.mxu0 %v2684
        %v2754 = vpop.f32.mrf.mxu0
        %v2755 = vadd.f32 %v2648, %v2754
        %v2756 = vpop.f32.mrf.mxu0
        %v2757 = vadd.f32 %v2648, %v2756
        %2758 = vmatmul.bf16.gmra.mxu0 %v2687
        %v2759 = vpop.f32.mrf.mxu0
        %v2760 = vadd.f32 %v2648, %v2759
        %v2761 = vpop.f32.mrf.mxu0
        %v2762 = vadd.f32 %v2648, %v2761
        %2763 = vmatmul.bf16.gmra.mxu0 %v2690
        %v2764 = vpop.f32.mrf.mxu0
        %v2765 = vadd.f32 %v2648, %v2764
        %v2766 = vpop.f32.mrf.mxu0
        %v2767 = vadd.f32 %v2648, %v2766
        %2768 = vmatmul.bf16.gmra.mxu0 %v2693
        %v2769 = vpop.f32.mrf.mxu0
        %v2770 = vadd.f32 %v2648, %v2769
        %v2771 = vpop.f32.mrf.mxu0
        %v2772 = vadd.f32 %v2648, %v2771
        %2773 = vmatmul.bf16.gmra.mxu0 %v2696
        %v2774 = vpop.f32.mrf.mxu0
        %v2775 = vadd.f32 %v2648, %v2774
        %v2776 = vpop.f32.mrf.mxu0
        %v2777 = vadd.f32 %v2648, %v2776
        %2778 = vmatmul.bf16.gmra.mxu0 %v2699
        %v2779 = vpop.f32.mrf.mxu0
        %v2780 = vadd.f32 %v2648, %v2779
        %v2781 = vpop.f32.mrf.mxu0
        %v2782 = vadd.f32 %v2648, %v2781
        %2783 = vmatmul.bf16.gmra.mxu0 %v2702
        %v2784 = vpop.f32.mrf.mxu0
        %v2785 = vadd.f32 %v2648, %v2784
        %v2786 = vpop.f32.mrf.mxu0
        %v2787 = vadd.f32 %v2648, %v2786
        %2788 = vmatmul.bf16.gmra.mxu0 %v2705
        %v2789 = vpop.f32.mrf.mxu0
        %v2790 = vadd.f32 %v2648, %v2789
        %v2791 = vpop.f32.mrf.mxu0
        %v2792 = vadd.f32 %v2648, %v2791
        %2793 = vmatmul.bf16.gmra.mxu0 %v2708
        %v2794 = vpop.f32.mrf.mxu0
        %v2795 = vadd.f32 %v2648, %v2794
        %v2796 = vpop.f32.mrf.mxu0
        %v2797 = vadd.f32 %v2648, %v2796
        %2798 = vdwg.mxu0
        %v2799 = vld [vmem:[%s267] sm:$0xf]
        %v2800 = vld [vmem:[%s267 + $0x4] sm:$0xf]
        %v2801 = vld [vmem:[%s267 + $0x8] sm:$0xf]
        %v2802 = vld [vmem:[%s267 + $0xc] sm:$0xf]
        %v2803 = vld [vmem:[%s267 + $0x10] sm:$0xf]
        %v2804 = vld [vmem:[%s267 + $0x14] sm:$0xf]
        %v2805 = vld [vmem:[%s267 + $0x18] sm:$0xf]
        %v2806 = vld [vmem:[%s267 + $0x1c] sm:$0xf]
        %v2807 = vld [vmem:[%s267 + $0x20] sm:$0xf]
        %v2808 = vld [vmem:[%s267 + $0x24] sm:$0xf]
        %v2809 = vld [vmem:[%s267 + $0x28] sm:$0xf]
        %v2810 = vld [vmem:[%s267 + $0x2c] sm:$0xf]
        %v2811 = vld [vmem:[%s267 + $0x30] sm:$0xf]
        %v2812 = vld [vmem:[%s267 + $0x34] sm:$0xf]
        %v2813 = vld [vmem:[%s267 + $0x38] sm:$0xf]
        %v2814 = vld [vmem:[%s267 + $0x3c] sm:$0xf]
        %v2815 = vld [vmem:[%s267 + $0x40] sm:$0xf]
        %v2816 = vld [vmem:[%s267 + $0x44] sm:$0xf]
        %v2817 = vld [vmem:[%s267 + $0x48] sm:$0xf]
        %v2818 = vld [vmem:[%s267 + $0x4c] sm:$0xf]
        %v2819 = vld [vmem:[%s267 + $0x50] sm:$0xf]
        %v2820 = vld [vmem:[%s267 + $0x54] sm:$0xf]
        %v2821 = vld [vmem:[%s267 + $0x58] sm:$0xf]
        %v2822 = vld [vmem:[%s267 + $0x5c] sm:$0xf]
        %v2823 = vld [vmem:[%s267 + $0x60] sm:$0xf]
        %v2824 = vld [vmem:[%s267 + $0x64] sm:$0xf]
        %v2825 = vld [vmem:[%s267 + $0x68] sm:$0xf]
        %v2826 = vld [vmem:[%s267 + $0x6c] sm:$0xf]
        %v2827 = vld [vmem:[%s267 + $0x70] sm:$0xf]
        %v2828 = vld [vmem:[%s267 + $0x74] sm:$0xf]
        %v2829 = vld [vmem:[%s267 + $0x78] sm:$0xf]
        %v2830 = vld [vmem:[%s267 + $0x7c] sm:$0xf]
        %v2831 = vunpack.c.l.bf16 %v2799
        %v2832 = vunpack.c.l.bf16 %v2800
        %v2833 = vunpack.c.l.bf16 %v2801
        %v2834 = vunpack.c.l.bf16 %v2802
        %v2835 = vunpack.c.l.bf16 %v2803
        %v2836 = vunpack.c.l.bf16 %v2804
        %v2837 = vunpack.c.l.bf16 %v2805
        %v2838 = vunpack.c.l.bf16 %v2806
        %v2839 = vunpack.c.l.bf16 %v2807
        %v2840 = vunpack.c.l.bf16 %v2808
        %v2841 = vunpack.c.l.bf16 %v2809
        %v2842 = vunpack.c.l.bf16 %v2810
        %v2843 = vunpack.c.l.bf16 %v2811
        %v2844 = vunpack.c.l.bf16 %v2812
        %v2845 = vunpack.c.l.bf16 %v2813
        %v2846 = vunpack.c.l.bf16 %v2814
        %v2847 = vunpack.c.l.bf16 %v2815
        %v2848 = vunpack.c.l.bf16 %v2816
        %v2849 = vunpack.c.l.bf16 %v2817
        %v2850 = vunpack.c.l.bf16 %v2818
        %v2851 = vunpack.c.l.bf16 %v2819
        %v2852 = vunpack.c.l.bf16 %v2820
        %v2853 = vunpack.c.l.bf16 %v2821
        %v2854 = vunpack.c.l.bf16 %v2822
        %v2855 = vunpack.c.l.bf16 %v2823
        %v2856 = vunpack.c.l.bf16 %v2824
        %v2857 = vunpack.c.l.bf16 %v2825
        %v2858 = vunpack.c.l.bf16 %v2826
        %v2859 = vunpack.c.l.bf16 %v2827
        %v2860 = vunpack.c.l.bf16 %v2828
        %v2861 = vunpack.c.l.bf16 %v2829
        %v2862 = vunpack.c.l.bf16 %v2830
        %v2863 = vmax.f32 %v2831, 0.0
        %v2864 = vmax.f32 %v2832, 0.0
        %v2865 = vmax.f32 %v2833, 0.0
        %v2866 = vmax.f32 %v2834, 0.0
        %v2867 = vmax.f32 %v2835, 0.0
        %v2868 = vmax.f32 %v2836, 0.0
        %v2869 = vmax.f32 %v2837, 0.0
        %v2870 = vmax.f32 %v2838, 0.0
        %v2871 = vmax.f32 %v2839, 0.0
        %v2872 = vmax.f32 %v2840, 0.0
        %v2873 = vmax.f32 %v2841, 0.0
        %v2874 = vmax.f32 %v2842, 0.0
        %v2875 = vmax.f32 %v2843, 0.0
        %v2876 = vmax.f32 %v2844, 0.0
        %v2877 = vmax.f32 %v2845, 0.0
        %v2878 = vmax.f32 %v2846, 0.0
        %v2879 = vmax.f32 %v2847, 0.0
        %v2880 = vmax.f32 %v2848, 0.0
        %v2881 = vmax.f32 %v2849, 0.0
        %v2882 = vmax.f32 %v2850, 0.0
        %v2883 = vmax.f32 %v2851, 0.0
        %v2884 = vmax.f32 %v2852, 0.0
        %v2885 = vmax.f32 %v2853, 0.0
        %v2886 = vmax.f32 %v2854, 0.0
        %v2887 = vmax.f32 %v2855, 0.0
        %v2888 = vmax.f32 %v2856, 0.0
        %v2889 = vmax.f32 %v2857, 0.0
        %v2890 = vmax.f32 %v2858, 0.0
        %v2891 = vmax.f32 %v2859, 0.0
        %v2892 = vmax.f32 %v2860, 0.0
        %v2893 = vmax.f32 %v2861, 0.0
        %v2894 = vmax.f32 %v2862, 0.0
        %v2895 = vpack.c.bf16 %v2863, %v2863
        %v2896 = vpack.c.bf16 %v2864, %v2864
        %v2897 = vpack.c.bf16 %v2865, %v2865
        %v2898 = vpack.c.bf16 %v2866, %v2866
        %v2899 = vpack.c.bf16 %v2867, %v2867
        %v2900 = vpack.c.bf16 %v2868, %v2868
        %v2901 = vpack.c.bf16 %v2869, %v2869
        %v2902 = vpack.c.bf16 %v2870, %v2870
        %v2903 = vpack.c.bf16 %v2871, %v2871
        %v2904 = vpack.c.bf16 %v2872, %v2872
        %v2905 = vpack.c.bf16 %v2873, %v2873
        %v2906 = vpack.c.bf16 %v2874, %v2874
        %v2907 = vpack.c.bf16 %v2875, %v2875
        %v2908 = vpack.c.bf16 %v2876, %v2876
        %v2909 = vpack.c.bf16 %v2877, %v2877
        %v2910 = vpack.c.bf16 %v2878, %v2878
        %v2911 = vpack.c.bf16 %v2879, %v2879
        %v2912 = vpack.c.bf16 %v2880, %v2880
        %v2913 = vpack.c.bf16 %v2881, %v2881
        %v2914 = vpack.c.bf16 %v2882, %v2882
        %v2915 = vpack.c.bf16 %v2883, %v2883
        %v2916 = vpack.c.bf16 %v2884, %v2884
        %v2917 = vpack.c.bf16 %v2885, %v2885
        %v2918 = vpack.c.bf16 %v2886, %v2886
        %v2919 = vpack.c.bf16 %v2887, %v2887
        %v2920 = vpack.c.bf16 %v2888, %v2888
        %v2921 = vpack.c.bf16 %v2889, %v2889
        %v2922 = vpack.c.bf16 %v2890, %v2890
        %v2923 = vpack.c.bf16 %v2891, %v2891
        %v2924 = vpack.c.bf16 %v2892, %v2892
        %v2925 = vpack.c.bf16 %v2893, %v2893
        %v2926 = vpack.c.bf16 %v2894, %v2894
        %v2927 = vunpack.c.l.bf16 %v2895
        %v2928 = vunpack.c.l.bf16 %v2896
        %v2929 = vunpack.c.l.bf16 %v2897
        %v2930 = vunpack.c.l.bf16 %v2898
        %v2931 = vunpack.c.l.bf16 %v2899
        %v2932 = vunpack.c.l.bf16 %v2900
        %v2933 = vunpack.c.l.bf16 %v2901
        %v2934 = vunpack.c.l.bf16 %v2902
        %v2935 = vunpack.c.l.bf16 %v2903
        %v2936 = vunpack.c.l.bf16 %v2904
        %v2937 = vunpack.c.l.bf16 %v2905
        %v2938 = vunpack.c.l.bf16 %v2906
        %v2939 = vunpack.c.l.bf16 %v2907
        %v2940 = vunpack.c.l.bf16 %v2908
        %v2941 = vunpack.c.l.bf16 %v2909
        %v2942 = vunpack.c.l.bf16 %v2910
        %v2943 = vunpack.c.l.bf16 %v2911
        %v2944 = vunpack.c.l.bf16 %v2912
        %v2945 = vunpack.c.l.bf16 %v2913
        %v2946 = vunpack.c.l.bf16 %v2914
        %v2947 = vunpack.c.l.bf16 %v2915
        %v2948 = vunpack.c.l.bf16 %v2916
        %v2949 = vunpack.c.l.bf16 %v2917
        %v2950 = vunpack.c.l.bf16 %v2918
        %v2951 = vunpack.c.l.bf16 %v2919
        %v2952 = vunpack.c.l.bf16 %v2920
        %v2953 = vunpack.c.l.bf16 %v2921
        %v2954 = vunpack.c.l.bf16 %v2922
        %v2955 = vunpack.c.l.bf16 %v2923
        %v2956 = vunpack.c.l.bf16 %v2924
        %v2957 = vunpack.c.l.bf16 %v2925
        %v2958 = vunpack.c.l.bf16 %v2926
        %v2959 = vadd.f32 %v2720, %v2927
        %v2960 = vadd.f32 %v2722, %v2928
        %v2961 = vadd.f32 %v2725, %v2929
        %v2962 = vadd.f32 %v2727, %v2930
        %v2963 = vadd.f32 %v2730, %v2931
        %v2964 = vadd.f32 %v2732, %v2932
        %v2965 = vadd.f32 %v2735, %v2933
        %v2966 = vadd.f32 %v2737, %v2934
        %v2967 = vadd.f32 %v2740, %v2935
        %v2968 = vadd.f32 %v2742, %v2936
        %v2969 = vadd.f32 %v2745, %v2937
        %v2970 = vadd.f32 %v2747, %v2938
        %v2971 = vadd.f32 %v2750, %v2939
        %v2972 = vadd.f32 %v2752, %v2940
        %v2973 = vadd.f32 %v2755, %v2941
        %v2974 = vadd.f32 %v2757, %v2942
        %v2975 = vadd.f32 %v2760, %v2943
        %v2976 = vadd.f32 %v2762, %v2944
        %v2977 = vadd.f32 %v2765, %v2945
        %v2978 = vadd.f32 %v2767, %v2946
        %v2979 = vadd.f32 %v2770, %v2947
        %v2980 = vadd.f32 %v2772, %v2948
        %v2981 = vadd.f32 %v2775, %v2949
        %v2982 = vadd.f32 %v2777, %v2950
        %v2983 = vadd.f32 %v2780, %v2951
        %v2984 = vadd.f32 %v2782, %v2952
        %v2985 = vadd.f32 %v2785, %v2953
        %v2986 = vadd.f32 %v2787, %v2954
        %v2987 = vadd.f32 %v2790, %v2955
        %v2988 = vadd.f32 %v2792, %v2956
        %v2989 = vadd.f32 %v2795, %v2957
        %v2990 = vadd.f32 %v2797, %v2958
        %v2991 = vpack.c.bf16 %v2959, %v2959
        %v2992 = vpack.c.bf16 %v2960, %v2960
        %v2993 = vpack.c.bf16 %v2961, %v2961
        %v2994 = vpack.c.bf16 %v2962, %v2962
        %v2995 = vpack.c.bf16 %v2963, %v2963
        %v2996 = vpack.c.bf16 %v2964, %v2964
        %v2997 = vpack.c.bf16 %v2965, %v2965
        %v2998 = vpack.c.bf16 %v2966, %v2966
        %v2999 = vpack.c.bf16 %v2967, %v2967
        %v3000 = vpack.c.bf16 %v2968, %v2968
        %v3001 = vpack.c.bf16 %v2969, %v2969
        %v3002 = vpack.c.bf16 %v2970, %v2970
        %v3003 = vpack.c.bf16 %v2971, %v2971
        %v3004 = vpack.c.bf16 %v2972, %v2972
        %v3005 = vpack.c.bf16 %v2973, %v2973
        %v3006 = vpack.c.bf16 %v2974, %v2974
        %v3007 = vpack.c.bf16 %v2975, %v2975
        %v3008 = vpack.c.bf16 %v2976, %v2976
        %v3009 = vpack.c.bf16 %v2977, %v2977
        %v3010 = vpack.c.bf16 %v2978, %v2978
        %v3011 = vpack.c.bf16 %v2979, %v2979
        %v3012 = vpack.c.bf16 %v2980, %v2980
        %v3013 = vpack.c.bf16 %v2981, %v2981
        %v3014 = vpack.c.bf16 %v2982, %v2982
        %v3015 = vpack.c.bf16 %v2983, %v2983
        %v3016 = vpack.c.bf16 %v2984, %v2984
        %v3017 = vpack.c.bf16 %v2985, %v2985
        %v3018 = vpack.c.bf16 %v2986, %v2986
        %v3019 = vpack.c.bf16 %v2987, %v2987
        %v3020 = vpack.c.bf16 %v2988, %v2988
        %v3021 = vpack.c.bf16 %v2989, %v2989
        %v3022 = vpack.c.bf16 %v2990, %v2990
        %3023 = vst [vmem:[%s298] sm:$0xf] %v2991
        %3024 = vst [vmem:[%s298 + $0x4] sm:$0xf] %v2992
        %3025 = vst [vmem:[%s298 + $0x8] sm:$0xf] %v2993
        %3026 = vst [vmem:[%s298 + $0xc] sm:$0xf] %v2994
        %3027 = vst [vmem:[%s298 + $0x10] sm:$0xf] %v2995
        %3028 = vst [vmem:[%s298 + $0x14] sm:$0xf] %v2996
        %3029 = vst [vmem:[%s298 + $0x18] sm:$0xf] %v2997
        %3030 = vst [vmem:[%s298 + $0x1c] sm:$0xf] %v2998
        %3031 = vst [vmem:[%s298 + $0x20] sm:$0xf] %v2999
        %3032 = vst [vmem:[%s298 + $0x24] sm:$0xf] %v3000
        %3033 = vst [vmem:[%s298 + $0x28] sm:$0xf] %v3001
        %3034 = vst [vmem:[%s298 + $0x2c] sm:$0xf] %v3002
        %3035 = vst [vmem:[%s298 + $0x30] sm:$0xf] %v3003
        %3036 = vst [vmem:[%s298 + $0x34] sm:$0xf] %v3004
        %3037 = vst [vmem:[%s298 + $0x38] sm:$0xf] %v3005
        %3038 = vst [vmem:[%s298 + $0x3c] sm:$0xf] %v3006
        %3039 = vst [vmem:[%s298 + $0x40] sm:$0xf] %v3007
        %3040 = vst [vmem:[%s298 + $0x44] sm:$0xf] %v3008
        %3041 = vst [vmem:[%s298 + $0x48] sm:$0xf] %v3009
        %3042 = vst [vmem:[%s298 + $0x4c] sm:$0xf] %v3010
        %3043 = vst [vmem:[%s298 + $0x50] sm:$0xf] %v3011
        %3044 = vst [vmem:[%s298 + $0x54] sm:$0xf] %v3012
        %3045 = vst [vmem:[%s298 + $0x58] sm:$0xf] %v3013
        %3046 = vst [vmem:[%s298 + $0x5c] sm:$0xf] %v3014
        %3047 = vst [vmem:[%s298 + $0x60] sm:$0xf] %v3015
        %3048 = vst [vmem:[%s298 + $0x64] sm:$0xf] %v3016
        %3049 = vst [vmem:[%s298 + $0x68] sm:$0xf] %v3017
        %3050 = vst [vmem:[%s298 + $0x6c] sm:$0xf] %v3018
        %3051 = vst [vmem:[%s298 + $0x70] sm:$0xf] %v3019
        %3052 = vst [vmem:[%s298 + $0x74] sm:$0xf] %v3020
        %3053 = vst [vmem:[%s298 + $0x78] sm:$0xf] %v3021
        %3054 = vst [vmem:[%s298 + $0x7c] sm:$0xf] %v3022
        %s3055 = sand.u32 %s184, 1
        %s3056 = scalar_lea.sflag [#allocation5], %s3055
        %s3057 = sand.u32 %s184, 1
        %s3058 = smul.addr %s3057, 128
        %s3059 = scalar_lea.vmem [#allocation6], %s3058
        // Predicated region
        $region53: #{bottleneck_pallas.1} parent=47 // pred_check
          %p3060 = pneg %p194
        $region54: #{bottleneck_pallas.1} parent=47 // pred_check_branch
          %3062 = sbr.rel (%p3060) target = $region56
        $region55: #{bottleneck_pallas.1} parent=47 // pred_region
          %3064 = vsyncadd %s3056, 0
          %s3065 = smul.addr %s24, 32
          %s3066 = smul.addr %s3065, 4
          %s3067 = scalar_lea.hbm %s7, %s3066
          %s3068 = sshll.u32 %s3059, 4
          %s3069 = int_to_ptr.vmem [resolvable:$true] %s3068
          %s3070 = sshll.u32 %s3067, 4
          %s3071 = int_to_ptr.hbm [resolvable:$true] %s3070
          %3076 = dma.vmem_to_hbm [thread:$0]  %s3069, 2048, %s3071, %s3056, 64, 64, 4
        $region56: #{bottleneck_pallas.1} parent=47 // pred_fallthru
          _
      $region48: #{bottleneck_pallas.1} parent=5 // pred_fallthru
        _
      %p3077 = scmp.le.s32.totalorder 2, %s19
      // Predicated region
      $region57: #{bottleneck_pallas.1} parent=5 // pred_check
        %p3078 = pneg %p3077
      $region58: #{bottleneck_pallas.1} parent=5 // pred_check_branch
        %3080 = sbr.rel (%p3078) target = $region60
      $region59: #{bottleneck_pallas.1} parent=5 // pred_region
        %s3081 = ssub.s32 %s19, 2
        // Predicated region
        $region61: #{bottleneck_pallas.1} parent=59 // pred_check
          %p3082 = pneg %p200
        $region62: #{bottleneck_pallas.1} parent=59 // pred_check_branch
          %3084 = sbr.rel (%p3082) target = $region64
        $region63: #{bottleneck_pallas.1} parent=59 // pred_region
          %s3085 = sand.u32 %s185, 1
          %s3086 = scalar_lea.sflag [#allocation5], %s3085
          %s3087 = sand.u32 %s185, 1
          %s3088 = smul.addr %s3087, 128
          %s3089 = scalar_lea.vmem [#allocation6], %s3088
          %3091 = dma.done %s3086, 2048
        $region64: #{bottleneck_pallas.1} parent=59 // pred_fallthru
          _
      $region60: #{bottleneck_pallas.1} parent=5 // pred_fallthru
        _
    $region6: #{bottleneck_pallas.1} parent=1 // loop_footer
      %s23 = sadd.s32 1, %s19
    $region7: #{bottleneck_pallas.1} parent=1 // loop_footer_branch
      %18 = sbr.rel target = $region3
    $region8: #{bottleneck_pallas.1} parent=1 // loop_exit
      _
    %3092 = vsyncpa [#allocation4], 1
    %s3093 = scalar_lea.sflag [#allocation4], 1
    %3094 = vsyncpa %s3093, 1
    %3095 = vsyncpa [#allocation5], 1
    %s3096 = scalar_lea.sflag [#allocation5], 1
    %3097 = vsyncpa %s3096, 1

</llo_original>
